<compile_context>
chip_gen: v5e
topology: v5e:2x2
jax: 0.10.0
libtpu: 0.0.40
codegen_flags: <defaults>
</compile_context>

<pallas_src>
import jax
import jax.numpy as jnp
from jax import lax
from jax.experimental import pallas as pl
from jax.experimental.pallas import tpu as pltpu


# ----------------------------- Pallas kernel -------------------------------

def _make_kernel(T, Bp, H):
    """Kernel closure over static sizes. Gate column order (8H wide):
       [i_f | i_b | f_f | f_b | o_f | o_b | g_f | g_b], each block H wide."""
    H2, H4, H6 = 2 * H, 4 * H, 6 * H

    def kernel(x_ref,      # (T*Bp, 2D)  rows t*Bp+b = [x[b,t,:] | x[b,T-1-t,:]]
               wih_ref,    # (2D, 8H)    block-diag fused input weights
               whh_ref,    # (2H, 8H)    block-diag fused recurrent weights
               b_ref,      # (1, 8H)     fused biases (b_ih + b_hh), gate-interleaved
               fcw_ref,    # (2H, Op)    fc weight, lane-padded
               fcb_ref,    # (1, Op)
               out_ref,    # (T*Bp, Op)  time-major, lane-dense output slab
               gx_ref,     # scratch (T*Bp, 8H)
               h_ref):     # scratch (T*Bp, 2H)  [h_fwd | h_bwd] per time row
        # ---- Prologue: one fused MXU pass for both directions' input gates ----
        gx_ref[...] = (jnp.dot(x_ref[...], wih_ref[...],
                               preferred_element_type=jnp.float32) + b_ref[...])

        whh = whh_ref[...]   # hoisted: read once, lives in vregs across the loop

        # ---- Fused fwd/bwd recurrence: one matmul + one cell per step ----
        def step(t, carry):
            h_cat, c_cat = carry                         # (Bp, 2H) each, [fwd | bwd]
            row_f = pl.multiple_of(t * Bp, Bp)           # forward time t
            row_b = pl.multiple_of((T - 1 - t) * Bp, Bp) # backward time T-1-t

            gates = gx_ref[pl.ds(row_f, Bp), :] + jnp.dot(
                h_cat, whh, preferred_element_type=jnp.float32)     # (Bp, 8H)

            sig = jax.nn.sigmoid(gates[:, :H6])          # [i_f i_b f_f f_b o_f o_b] in one op
            g_cat = jnp.tanh(gates[:, H6:])              # [g_f g_b]
            i_cat = sig[:, :H2]
            f_cat = sig[:, H2:H4]
            o_cat = sig[:, H4:H6]

            c_cat = f_cat * c_cat + i_cat * g_cat
            h_cat = o_cat * jnp.tanh(c_cat)

            # Scatter to time-indexed rows; lane halves: fwd -> [0:H), bwd -> [H:2H).
            h_ref[pl.ds(row_f, Bp), pl.ds(0, H)] = h_cat[:, :H]
            h_ref[pl.ds(row_b, Bp), pl.ds(H, H)] = h_cat[:, H:]
            return h_cat, c_cat

        zeros = jnp.zeros((Bp, H2), jnp.float32)
        lax.fori_loop(0, T, step, (zeros, zeros),
                      unroll=True if T <= 16 else 4)

        # ---- Epilogue: single fused Linear, lane-dense output store ----
        out_ref[...] = (jnp.dot(h_ref[...], fcw_ref[...],
                                preferred_element_type=jnp.float32) + fcb_ref[...])

    return kernel


# ------------------------------- wrapper ------------------------------------

def rnn_decoder_forward(x, params):
    (wih_f, whh_f, b_f, wih_b, whh_b, b_b, fcw, fcb) = params
    B, T, D = x.shape
    H = whh_f.shape[0]
    O = fcw.shape[1]
    Bp = ((B + 7) // 8) * 8          # pad batch to a sublane multiple (row-aligned slices)
    Op = ((O + 127) // 128) * 128    # lane-dense output

    # ---- wrapper-side weight fusion (plain XLA, one-time) ----
    def blocks(w):
        # per-direction layout is [i, f, g, o]; return (i, f, o, g)
        return w[..., :H], w[..., H:2 * H], w[..., 3 * H:], w[..., 2 * H:3 * H]

    i_f, f_f, o_f, g_f = blocks(wih_f)
    i_b, f_b, o_b, g_b = blocks(wih_b)
    zD = jnp.zeros((D, H), jnp.float32)
    wih_cat = jnp.concatenate([
        jnp.concatenate([i_f, zD, f_f, zD, o_f, zD, g_f, zD], axis=1),
        jnp.concatenate([zD, i_b, zD, f_b, zD, o_b, zD, g_b], axis=1)], axis=0)   # (2D, 8H)

    hi_f, hf_f, ho_f, hg_f = blocks(whh_f)
    hi_b, hf_b, ho_b, hg_b = blocks(whh_b)
    zH = jnp.zeros((H, H), jnp.float32)
    whh_cat = jnp.concatenate([
        jnp.concatenate([hi_f, zH, hf_f, zH, ho_f, zH, hg_f, zH], axis=1),
        jnp.concatenate([zH, hi_b, zH, hf_b, zH, ho_b, zH, hg_b], axis=1)], axis=0)  # (2H, 8H)

    bi_f, bf_f, bo_f, bg_f = blocks(b_f)
    bi_b, bf_b, bo_b, bg_b = blocks(b_b)
    b_cat = jnp.concatenate([bi_f, bi_b, bf_f, bf_b, bo_f, bo_b, bg_f, bg_b], axis=1)  # (1, 8H)

    fcw_p = jnp.pad(fcw, ((0, 0), (0, Op - O)))          # rows already ordered [fwd | bwd]
    fcb_p = jnp.pad(fcb, ((0, 0), (0, Op - O)))

    # ---- time-major, batch-padded input with [x(t) | x(T-1-t)] lanes ----
    x_tm = jnp.swapaxes(x, 0, 1)                          # (T, B, D)
    x_tm = jnp.pad(x_tm, ((0, 0), (0, Bp - B), (0, 0)))   # (T, Bp, D)
    x_cat = jnp.concatenate([x_tm, x_tm[::-1]], axis=-1).reshape(T * Bp, 2 * D)

    flops = (2 * (T * Bp) * (2 * D) * (8 * H)        # prologue
             + 2 * T * Bp * (2 * H) * (8 * H)        # recurrence
             + 2 * (T * Bp) * (2 * H) * Op)          # epilogue
    transcendentals = 10 * T * Bp * H
    bytes_accessed = 4 * (x_cat.size + wih_cat.size + whh_cat.size + b_cat.size
                          + fcw_p.size + fcb_p.size + T * Bp * Op)

    vmem = pl.BlockSpec(memory_space=pltpu.MemorySpace.VMEM)
    out_tm = pl.pallas_call(
        _make_kernel(T, Bp, H),
        out_shape=jax.ShapeDtypeStruct((T * Bp, Op), jnp.float32),
        in_specs=[vmem] * 6,
        out_specs=vmem,
        scratch_shapes=[
            pltpu.VMEM((T * Bp, 8 * H), jnp.float32),    # gx (flat, time-major rows)
            pltpu.VMEM((T * Bp, 2 * H), jnp.float32),    # [h_fwd | h_bwd] per time row
        ],
        cost_estimate=pl.CostEstimate(flops=flops,
                                      transcendentals=transcendentals,
                                      bytes_accessed=bytes_accessed),
    )(x_cat, wih_cat, whh_cat, b_cat, fcw_p, fcb_p)

    out = out_tm.reshape(T, Bp, Op)[:, :B, :O]            # drop batch/lane padding
    return jnp.swapaxes(out, 0, 1)                        # (B, T, O)


# ------------------------- Pure-JAX reference -------------------------------

def _lstm_dir_ref(x, wih, whh, b):
    B, T, D = x.shape
    H = whh.shape[0]

    def step(carry, xt):
        h, c = carry
        gates = xt @ wih + b[0] + h @ whh
        i = jax.nn.sigmoid(gates[:, :H])
        f = jax.nn.sigmoid(gates[:, H:2 * H])
        g = jnp.tanh(gates[:, 2 * H:3 * H])
        o = jax.nn.sigmoid(gates[:, 3 * H:])
        c = f * c + i * g
        h = o * jnp.tanh(c)
        return (h, c), h

    h0 = jnp.zeros((B, H), jnp.float32)
    c0 = jnp.zeros((B, H), jnp.float32)
    (_, _), hs = lax.scan(step, (h0, c0), jnp.swapaxes(x, 0, 1))
    return jnp.swapaxes(hs, 0, 1)  # (B, T, H)


def rnn_decoder_ref(x, params):
    (wih_f, whh_f, b_f, wih_b, whh_b, b_b, fcw, fcb) = params
    hf = _lstm_dir_ref(x, wih_f, whh_f, b_f)
    hb = _lstm_dir_ref(x[:, ::-1, :], wih_b, whh_b, b_b)[:, ::-1, :]
    h = jnp.concatenate([hf, hb], axis=-1)
    return h @ fcw + fcb[0]


# ------------------------------- main ---------------------------------------

def init_params(key, D, H, O):
    """Deterministic init mimicking PyTorch LSTM/Linear uniform(-1/sqrt(H), 1/sqrt(H))."""
    ks = jax.random.split(key, 10)
    k = 1.0 / jnp.sqrt(jnp.float32(H))

    def u(kk, shape):
        return jax.random.uniform(kk, shape, jnp.float32, -k, k)

    wih_f = u(ks[0], (D, 4 * H))
    whh_f = u(ks[1], (H, 4 * H))
    b_f = (u(ks[2], (1, 4 * H)) + u(ks[3], (1, 4 * H)))   # bias_ih + bias_hh
    wih_b = u(ks[4], (D, 4 * H))
    whh_b = u(ks[5], (H, 4 * H))
    b_b = (u(ks[6], (1, 4 * H)) + u(ks[7], (1, 4 * H)))
    kf = 1.0 / jnp.sqrt(jnp.float32(2 * H))
    fcw = jax.random.uniform(ks[8], (2 * H, O), jnp.float32, -kf, kf)
    fcb = jax.random.uniform(ks[9], (1, O), jnp.float32, -kf, kf)
    return (wih_f, whh_f, b_f, wih_b, whh_b, b_b, fcw, fcb)


if __name__ == "__main__":
    B, T, D, H, O = 2, 8, 16, 32, 16   # batch, seq, input_size, hidden_size, output_size

    key = jax.random.PRNGKey(0)
    kx, kp = jax.random.split(key)
    x = jax.random.normal(kx, (B, T, D), jnp.float32)
    params = init_params(kp, D, H, O)

    out = jax.block_until_ready(rnn_decoder_forward(x, params))
    ref = rnn_decoder_ref(x, params)

    assert out.shape == (B, T, O), out.shape
    assert jnp.allclose(out, ref, atol=1e-4, rtol=1e-4), \
        f"max abs err {jnp.max(jnp.abs(out - ref))}"

    print("KERNEL_OK")
</pallas_src>

<mosaic_0001>
module attributes {stable_mosaic.version = 11 : i64} {
  func.func @kernel(%arg0: memref<64x32xf32, #tpu.memory_space<vmem>>, %arg1: memref<32x256xf32, #tpu.memory_space<vmem>>, %arg2: memref<64x256xf32, #tpu.memory_space<vmem>>, %arg3: memref<1x256xf32, #tpu.memory_space<vmem>>, %arg4: memref<64x128xf32, #tpu.memory_space<vmem>>, %arg5: memref<1x128xf32, #tpu.memory_space<vmem>>, %arg6: memref<64x128xf32, #tpu.memory_space<vmem>>, %arg7: memref<64x256xf32, #tpu.memory_space<vmem>>, %arg8: memref<64x64xf32, #tpu.memory_space<vmem>>) attributes {dimension_semantics = [], scalar_prefetch = 0 : i64, scratch_operands = 2 : i64, tpu.core_type = #tpu.core_type<tc>} {
    %c0 = arith.constant 0 : index
    %c0_0 = arith.constant 0 : index
    %0 = vector.load %arg0[%c0, %c0_0] : memref<64x32xf32, #tpu.memory_space<vmem>>, vector<64x32xf32>
    %c0_1 = arith.constant 0 : index
    %c0_2 = arith.constant 0 : index
    %1 = vector.load %arg1[%c0_1, %c0_2] : memref<32x256xf32, #tpu.memory_space<vmem>>, vector<32x256xf32>
    %cst = arith.constant dense<0.000000e+00> : vector<64x256xf32>
    %2 = tpu.matmul %0, %1, %cst {dimension_numbers = #tpu.dot_dimension_numbers<[1], [0], [0], [1], [0, 0, 1, 1], [], []>} : vector<64x32xf32>, vector<32x256xf32>, vector<64x256xf32> -> vector<64x256xf32>
    %c0_3 = arith.constant 0 : index
    %c0_4 = arith.constant 0 : index
    %3 = vector.load %arg3[%c0_3, %c0_4] : memref<1x256xf32, #tpu.memory_space<vmem>>, vector<1x256xf32>
    %4 = vector.broadcast %3 : vector<1x256xf32> to vector<64x256xf32>
    %5 = arith.addf %2, %4 : vector<64x256xf32>
    %c0_5 = arith.constant 0 : index
    %c0_6 = arith.constant 0 : index
    %6 = vector.load %arg7[%c0_5, %c0_6] : memref<64x256xf32, #tpu.memory_space<vmem>>, vector<64x256xf32>
    tpu.vector_store %arg7[%c0_5, %c0_6], %5 {strides = array<i32>} : memref<64x256xf32, #tpu.memory_space<vmem>>, vector<64x256xf32>,
    %c0_7 = arith.constant 0 : index
    %c0_8 = arith.constant 0 : index
    %7 = vector.load %arg2[%c0_7, %c0_8] : memref<64x256xf32, #tpu.memory_space<vmem>>, vector<64x256xf32>
    %cst_9 = arith.constant 0.000000e+00 : f32
    %8 = vector.broadcast %cst_9 : f32 to vector<8x64xf32>
    %c0_i32 = arith.constant 0 : i32
    %c8_i32 = arith.constant 8 : i32
    %9 = arith.muli %c0_i32, %c8_i32 : i32
    %10 = tpu.assume_multiple %9, 8 : i32
    %c7_i32 = arith.constant 7 : i32
    %11 = arith.subi %c7_i32, %c0_i32 : i32
    %c8_i32_10 = arith.constant 8 : i32
    %12 = arith.muli %11, %c8_i32_10 : i32
    %13 = tpu.assume_multiple %12, 8 : i32
    %14 = arith.index_cast %10 : i32 to index
    %c0_11 = arith.constant 0 : index
    %15 = vector.load %arg7[%14, %c0_11] : memref<64x256xf32, #tpu.memory_space<vmem>>, vector<8x256xf32>
    %cst_12 = arith.constant dense<0.000000e+00> : vector<8x256xf32>
    %16 = tpu.matmul %8, %7, %cst_12 {dimension_numbers = #tpu.dot_dimension_numbers<[1], [0], [0], [1], [0, 0, 1, 1], [], []>} : vector<8x64xf32>, vector<64x256xf32>, vector<8x256xf32> -> vector<8x256xf32>
    %17 = arith.addf %15, %16 : vector<8x256xf32>
    %18 = vector.extract_strided_slice %17 {offsets = [0, 0], sizes = [8, 192], strides = [1, 1]} : vector<8x256xf32> to vector<8x192xf32>
    %19 = arith.negf %18 : vector<8x192xf32>
    %20 = math.exp %19 : vector<8x192xf32>
    %cst_13 = arith.constant 1.000000e+00 : f32
    %21 = vector.broadcast %cst_13 : f32 to vector<8x192xf32>
    %22 = arith.addf %21, %20 : vector<8x192xf32>
    %23 = arith.divf %21, %22 : vector<8x192xf32>
    %24 = vector.extract_strided_slice %17 {offsets = [0, 192], sizes = [8, 64], strides = [1, 1]} : vector<8x256xf32> to vector<8x64xf32>
    %25 = math.tanh %24 : vector<8x64xf32>
    %26 = vector.extract_strided_slice %23 {offsets = [0, 0], sizes = [8, 64], strides = [1, 1]} : vector<8x192xf32> to vector<8x64xf32>
    %27 = vector.extract_strided_slice %23 {offsets = [0, 64], sizes = [8, 64], strides = [1, 1]} : vector<8x192xf32> to vector<8x64xf32>
    %28 = vector.extract_strided_slice %23 {offsets = [0, 128], sizes = [8, 64], strides = [1, 1]} : vector<8x192xf32> to vector<8x64xf32>
    %29 = arith.mulf %27, %8 : vector<8x64xf32>
    %30 = arith.mulf %26, %25 : vector<8x64xf32>
    %31 = arith.addf %29, %30 : vector<8x64xf32>
    %32 = math.tanh %31 : vector<8x64xf32>
    %33 = arith.mulf %28, %32 : vector<8x64xf32>
    %34 = vector.extract_strided_slice %33 {offsets = [0, 0], sizes = [8, 32], strides = [1, 1]} : vector<8x64xf32> to vector<8x32xf32>
    %35 = arith.index_cast %10 : i32 to index
    %c0_14 = arith.constant 0 : index
    %36 = vector.load %arg8[%35, %c0_14] : memref<64x64xf32, #tpu.memory_space<vmem>>, vector<8x32xf32>
    tpu.vector_store %arg8[%35, %c0_14], %34 {strides = array<i32>} : memref<64x64xf32, #tpu.memory_space<vmem>>, vector<8x32xf32>,
    %37 = vector.extract_strided_slice %33 {offsets = [0, 32], sizes = [8, 32], strides = [1, 1]} : vector<8x64xf32> to vector<8x32xf32>
    %38 = arith.index_cast %13 : i32 to index
    %c32 = arith.constant 32 : index
    %39 = vector.load %arg8[%38, %c32] : memref<64x64xf32, #tpu.memory_space<vmem>>, vector<8x32xf32>
    tpu.vector_store %arg8[%38, %c32], %37 {strides = array<i32>} : memref<64x64xf32, #tpu.memory_space<vmem>>, vector<8x32xf32>,
    %c1_i32 = arith.constant 1 : i32
    %c8_i32_15 = arith.constant 8 : i32
    %40 = arith.muli %c1_i32, %c8_i32_15 : i32
    %41 = tpu.assume_multiple %40, 8 : i32
    %c7_i32_16 = arith.constant 7 : i32
    %42 = arith.subi %c7_i32_16, %c1_i32 : i32
    %c8_i32_17 = arith.constant 8 : i32
    %43 = arith.muli %42, %c8_i32_17 : i32
    %44 = tpu.assume_multiple %43, 8 : i32
    %45 = arith.index_cast %41 : i32 to index
    %c0_18 = arith.constant 0 : index
    %46 = vector.load %arg7[%45, %c0_18] : memref<64x256xf32, #tpu.memory_space<vmem>>, vector<8x256xf32>
    %cst_19 = arith.constant dense<0.000000e+00> : vector<8x256xf32>
    %47 = tpu.matmul %33, %7, %cst_19 {dimension_numbers = #tpu.dot_dimension_numbers<[1], [0], [0], [1], [0, 0, 1, 1], [], []>} : vector<8x64xf32>, vector<64x256xf32>, vector<8x256xf32> -> vector<8x256xf32>
    %48 = arith.addf %46, %47 : vector<8x256xf32>
    %49 = vector.extract_strided_slice %48 {offsets = [0, 0], sizes = [8, 192], strides = [1, 1]} : vector<8x256xf32> to vector<8x192xf32>
    %50 = arith.negf %49 : vector<8x192xf32>
    %51 = math.exp %50 : vector<8x192xf32>
    %cst_20 = arith.constant 1.000000e+00 : f32
    %52 = vector.broadcast %cst_20 : f32 to vector<8x192xf32>
    %53 = arith.addf %52, %51 : vector<8x192xf32>
    %54 = arith.divf %52, %53 : vector<8x192xf32>
    %55 = vector.extract_strided_slice %48 {offsets = [0, 192], sizes = [8, 64], strides = [1, 1]} : vector<8x256xf32> to vector<8x64xf32>
    %56 = math.tanh %55 : vector<8x64xf32>
    %57 = vector.extract_strided_slice %54 {offsets = [0, 0], sizes = [8, 64], strides = [1, 1]} : vector<8x192xf32> to vector<8x64xf32>
    %58 = vector.extract_strided_slice %54 {offsets = [0, 64], sizes = [8, 64], strides = [1, 1]} : vector<8x192xf32> to vector<8x64xf32>
    %59 = vector.extract_strided_slice %54 {offsets = [0, 128], sizes = [8, 64], strides = [1, 1]} : vector<8x192xf32> to vector<8x64xf32>
    %60 = arith.mulf %58, %31 : vector<8x64xf32>
    %61 = arith.mulf %57, %56 : vector<8x64xf32>
    %62 = arith.addf %60, %61 : vector<8x64xf32>
    %63 = math.tanh %62 : vector<8x64xf32>
    %64 = arith.mulf %59, %63 : vector<8x64xf32>
    %65 = vector.extract_strided_slice %64 {offsets = [0, 0], sizes = [8, 32], strides = [1, 1]} : vector<8x64xf32> to vector<8x32xf32>
    %66 = arith.index_cast %41 : i32 to index
    %c0_21 = arith.constant 0 : index
    %67 = vector.load %arg8[%66, %c0_21] : memref<64x64xf32, #tpu.memory_space<vmem>>, vector<8x32xf32>
    tpu.vector_store %arg8[%66, %c0_21], %65 {strides = array<i32>} : memref<64x64xf32, #tpu.memory_space<vmem>>, vector<8x32xf32>,
    %68 = vector.extract_strided_slice %64 {offsets = [0, 32], sizes = [8, 32], strides = [1, 1]} : vector<8x64xf32> to vector<8x32xf32>
    %69 = arith.index_cast %44 : i32 to index
    %c32_22 = arith.constant 32 : index
    %70 = vector.load %arg8[%69, %c32_22] : memref<64x64xf32, #tpu.memory_space<vmem>>, vector<8x32xf32>
    tpu.vector_store %arg8[%69, %c32_22], %68 {strides = array<i32>} : memref<64x64xf32, #tpu.memory_space<vmem>>, vector<8x32xf32>,
    %c2_i32 = arith.constant 2 : i32
    %c8_i32_23 = arith.constant 8 : i32
    %71 = arith.muli %c2_i32, %c8_i32_23 : i32
    %72 = tpu.assume_multiple %71, 8 : i32
    %c7_i32_24 = arith.constant 7 : i32
    %73 = arith.subi %c7_i32_24, %c2_i32 : i32
    %c8_i32_25 = arith.constant 8 : i32
    %74 = arith.muli %73, %c8_i32_25 : i32
    %75 = tpu.assume_multiple %74, 8 : i32
    %76 = arith.index_cast %72 : i32 to index
    %c0_26 = arith.constant 0 : index
    %77 = vector.load %arg7[%76, %c0_26] : memref<64x256xf32, #tpu.memory_space<vmem>>, vector<8x256xf32>
    %cst_27 = arith.constant dense<0.000000e+00> : vector<8x256xf32>
    %78 = tpu.matmul %64, %7, %cst_27 {dimension_numbers = #tpu.dot_dimension_numbers<[1], [0], [0], [1], [0, 0, 1, 1], [], []>} : vector<8x64xf32>, vector<64x256xf32>, vector<8x256xf32> -> vector<8x256xf32>
    %79 = arith.addf %77, %78 : vector<8x256xf32>
    %80 = vector.extract_strided_slice %79 {offsets = [0, 0], sizes = [8, 192], strides = [1, 1]} : vector<8x256xf32> to vector<8x192xf32>
    %81 = arith.negf %80 : vector<8x192xf32>
    %82 = math.exp %81 : vector<8x192xf32>
    %cst_28 = arith.constant 1.000000e+00 : f32
    %83 = vector.broadcast %cst_28 : f32 to vector<8x192xf32>
    %84 = arith.addf %83, %82 : vector<8x192xf32>
    %85 = arith.divf %83, %84 : vector<8x192xf32>
    %86 = vector.extract_strided_slice %79 {offsets = [0, 192], sizes = [8, 64], strides = [1, 1]} : vector<8x256xf32> to vector<8x64xf32>
    %87 = math.tanh %86 : vector<8x64xf32>
    %88 = vector.extract_strided_slice %85 {offsets = [0, 0], sizes = [8, 64], strides = [1, 1]} : vector<8x192xf32> to vector<8x64xf32>
    %89 = vector.extract_strided_slice %85 {offsets = [0, 64], sizes = [8, 64], strides = [1, 1]} : vector<8x192xf32> to vector<8x64xf32>
    %90 = vector.extract_strided_slice %85 {offsets = [0, 128], sizes = [8, 64], strides = [1, 1]} : vector<8x192xf32> to vector<8x64xf32>
    %91 = arith.mulf %89, %62 : vector<8x64xf32>
    %92 = arith.mulf %88, %87 : vector<8x64xf32>
    %93 = arith.addf %91, %92 : vector<8x64xf32>
    %94 = math.tanh %93 : vector<8x64xf32>
    %95 = arith.mulf %90, %94 : vector<8x64xf32>
    %96 = vector.extract_strided_slice %95 {offsets = [0, 0], sizes = [8, 32], strides = [1, 1]} : vector<8x64xf32> to vector<8x32xf32>
    %97 = arith.index_cast %72 : i32 to index
    %c0_29 = arith.constant 0 : index
    %98 = vector.load %arg8[%97, %c0_29] : memref<64x64xf32, #tpu.memory_space<vmem>>, vector<8x32xf32>
    tpu.vector_store %arg8[%97, %c0_29], %96 {strides = array<i32>} : memref<64x64xf32, #tpu.memory_space<vmem>>, vector<8x32xf32>,
    %99 = vector.extract_strided_slice %95 {offsets = [0, 32], sizes = [8, 32], strides = [1, 1]} : vector<8x64xf32> to vector<8x32xf32>
    %100 = arith.index_cast %75 : i32 to index
    %c32_30 = arith.constant 32 : index
    %101 = vector.load %arg8[%100, %c32_30] : memref<64x64xf32, #tpu.memory_space<vmem>>, vector<8x32xf32>
    tpu.vector_store %arg8[%100, %c32_30], %99 {strides = array<i32>} : memref<64x64xf32, #tpu.memory_space<vmem>>, vector<8x32xf32>,
    %c3_i32 = arith.constant 3 : i32
    %c8_i32_31 = arith.constant 8 : i32
    %102 = arith.muli %c3_i32, %c8_i32_31 : i32
    %103 = tpu.assume_multiple %102, 8 : i32
    %c7_i32_32 = arith.constant 7 : i32
    %104 = arith.subi %c7_i32_32, %c3_i32 : i32
    %c8_i32_33 = arith.constant 8 : i32
    %105 = arith.muli %104, %c8_i32_33 : i32
    %106 = tpu.assume_multiple %105, 8 : i32
    %107 = arith.index_cast %103 : i32 to index
    %c0_34 = arith.constant 0 : index
    %108 = vector.load %arg7[%107, %c0_34] : memref<64x256xf32, #tpu.memory_space<vmem>>, vector<8x256xf32>
    %cst_35 = arith.constant dense<0.000000e+00> : vector<8x256xf32>
    %109 = tpu.matmul %95, %7, %cst_35 {dimension_numbers = #tpu.dot_dimension_numbers<[1], [0], [0], [1], [0, 0, 1, 1], [], []>} : vector<8x64xf32>, vector<64x256xf32>, vector<8x256xf32> -> vector<8x256xf32>
    %110 = arith.addf %108, %109 : vector<8x256xf32>
    %111 = vector.extract_strided_slice %110 {offsets = [0, 0], sizes = [8, 192], strides = [1, 1]} : vector<8x256xf32> to vector<8x192xf32>
    %112 = arith.negf %111 : vector<8x192xf32>
    %113 = math.exp %112 : vector<8x192xf32>
    %cst_36 = arith.constant 1.000000e+00 : f32
    %114 = vector.broadcast %cst_36 : f32 to vector<8x192xf32>
    %115 = arith.addf %114, %113 : vector<8x192xf32>
    %116 = arith.divf %114, %115 : vector<8x192xf32>
    %117 = vector.extract_strided_slice %110 {offsets = [0, 192], sizes = [8, 64], strides = [1, 1]} : vector<8x256xf32> to vector<8x64xf32>
    %118 = math.tanh %117 : vector<8x64xf32>
    %119 = vector.extract_strided_slice %116 {offsets = [0, 0], sizes = [8, 64], strides = [1, 1]} : vector<8x192xf32> to vector<8x64xf32>
    %120 = vector.extract_strided_slice %116 {offsets = [0, 64], sizes = [8, 64], strides = [1, 1]} : vector<8x192xf32> to vector<8x64xf32>
    %121 = vector.extract_strided_slice %116 {offsets = [0, 128], sizes = [8, 64], strides = [1, 1]} : vector<8x192xf32> to vector<8x64xf32>
    %122 = arith.mulf %120, %93 : vector<8x64xf32>
    %123 = arith.mulf %119, %118 : vector<8x64xf32>
    %124 = arith.addf %122, %123 : vector<8x64xf32>
    %125 = math.tanh %124 : vector<8x64xf32>
    %126 = arith.mulf %121, %125 : vector<8x64xf32>
    %127 = vector.extract_strided_slice %126 {offsets = [0, 0], sizes = [8, 32], strides = [1, 1]} : vector<8x64xf32> to vector<8x32xf32>
    %128 = arith.index_cast %103 : i32 to index
    %c0_37 = arith.constant 0 : index
    %129 = vector.load %arg8[%128, %c0_37] : memref<64x64xf32, #tpu.memory_space<vmem>>, vector<8x32xf32>
    tpu.vector_store %arg8[%128, %c0_37], %127 {strides = array<i32>} : memref<64x64xf32, #tpu.memory_space<vmem>>, vector<8x32xf32>,
    %130 = vector.extract_strided_slice %126 {offsets = [0, 32], sizes = [8, 32], strides = [1, 1]} : vector<8x64xf32> to vector<8x32xf32>
    %131 = arith.index_cast %106 : i32 to index
    %c32_38 = arith.constant 32 : index
    %132 = vector.load %arg8[%131, %c32_38] : memref<64x64xf32, #tpu.memory_space<vmem>>, vector<8x32xf32>
    tpu.vector_store %arg8[%131, %c32_38], %130 {strides = array<i32>} : memref<64x64xf32, #tpu.memory_space<vmem>>, vector<8x32xf32>,
    %c4_i32 = arith.constant 4 : i32
    %c8_i32_39 = arith.constant 8 : i32
    %133 = arith.muli %c4_i32, %c8_i32_39 : i32
    %134 = tpu.assume_multiple %133, 8 : i32
    %c7_i32_40 = arith.constant 7 : i32
    %135 = arith.subi %c7_i32_40, %c4_i32 : i32
    %c8_i32_41 = arith.constant 8 : i32
    %136 = arith.muli %135, %c8_i32_41 : i32
    %137 = tpu.assume_multiple %136, 8 : i32
    %138 = arith.index_cast %134 : i32 to index
    %c0_42 = arith.constant 0 : index
    %139 = vector.load %arg7[%138, %c0_42] : memref<64x256xf32, #tpu.memory_space<vmem>>, vector<8x256xf32>
    %cst_43 = arith.constant dense<0.000000e+00> : vector<8x256xf32>
    %140 = tpu.matmul %126, %7, %cst_43 {dimension_numbers = #tpu.dot_dimension_numbers<[1], [0], [0], [1], [0, 0, 1, 1], [], []>} : vector<8x64xf32>, vector<64x256xf32>, vector<8x256xf32> -> vector<8x256xf32>
    %141 = arith.addf %139, %140 : vector<8x256xf32>
    %142 = vector.extract_strided_slice %141 {offsets = [0, 0], sizes = [8, 192], strides = [1, 1]} : vector<8x256xf32> to vector<8x192xf32>
    %143 = arith.negf %142 : vector<8x192xf32>
    %144 = math.exp %143 : vector<8x192xf32>
    %cst_44 = arith.constant 1.000000e+00 : f32
    %145 = vector.broadcast %cst_44 : f32 to vector<8x192xf32>
    %146 = arith.addf %145, %144 : vector<8x192xf32>
    %147 = arith.divf %145, %146 : vector<8x192xf32>
    %148 = vector.extract_strided_slice %141 {offsets = [0, 192], sizes = [8, 64], strides = [1, 1]} : vector<8x256xf32> to vector<8x64xf32>
    %149 = math.tanh %148 : vector<8x64xf32>
    %150 = vector.extract_strided_slice %147 {offsets = [0, 0], sizes = [8, 64], strides = [1, 1]} : vector<8x192xf32> to vector<8x64xf32>
    %151 = vector.extract_strided_slice %147 {offsets = [0, 64], sizes = [8, 64], strides = [1, 1]} : vector<8x192xf32> to vector<8x64xf32>
    %152 = vector.extract_strided_slice %147 {offsets = [0, 128], sizes = [8, 64], strides = [1, 1]} : vector<8x192xf32> to vector<8x64xf32>
    %153 = arith.mulf %151, %124 : vector<8x64xf32>
    %154 = arith.mulf %150, %149 : vector<8x64xf32>
    %155 = arith.addf %153, %154 : vector<8x64xf32>
    %156 = math.tanh %155 : vector<8x64xf32>
    %157 = arith.mulf %152, %156 : vector<8x64xf32>
    %158 = vector.extract_strided_slice %157 {offsets = [0, 0], sizes = [8, 32], strides = [1, 1]} : vector<8x64xf32> to vector<8x32xf32>
    %159 = arith.index_cast %134 : i32 to index
    %c0_45 = arith.constant 0 : index
    %160 = vector.load %arg8[%159, %c0_45] : memref<64x64xf32, #tpu.memory_space<vmem>>, vector<8x32xf32>
    tpu.vector_store %arg8[%159, %c0_45], %158 {strides = array<i32>} : memref<64x64xf32, #tpu.memory_space<vmem>>, vector<8x32xf32>,
    %161 = vector.extract_strided_slice %157 {offsets = [0, 32], sizes = [8, 32], strides = [1, 1]} : vector<8x64xf32> to vector<8x32xf32>
    %162 = arith.index_cast %137 : i32 to index
    %c32_46 = arith.constant 32 : index
    %163 = vector.load %arg8[%162, %c32_46] : memref<64x64xf32, #tpu.memory_space<vmem>>, vector<8x32xf32>
    tpu.vector_store %arg8[%162, %c32_46], %161 {strides = array<i32>} : memref<64x64xf32, #tpu.memory_space<vmem>>, vector<8x32xf32>,
    %c5_i32 = arith.constant 5 : i32
    %c8_i32_47 = arith.constant 8 : i32
    %164 = arith.muli %c5_i32, %c8_i32_47 : i32
    %165 = tpu.assume_multiple %164, 8 : i32
    %c7_i32_48 = arith.constant 7 : i32
    %166 = arith.subi %c7_i32_48, %c5_i32 : i32
    %c8_i32_49 = arith.constant 8 : i32
    %167 = arith.muli %166, %c8_i32_49 : i32
    %168 = tpu.assume_multiple %167, 8 : i32
    %169 = arith.index_cast %165 : i32 to index
    %c0_50 = arith.constant 0 : index
    %170 = vector.load %arg7[%169, %c0_50] : memref<64x256xf32, #tpu.memory_space<vmem>>, vector<8x256xf32>
    %cst_51 = arith.constant dense<0.000000e+00> : vector<8x256xf32>
    %171 = tpu.matmul %157, %7, %cst_51 {dimension_numbers = #tpu.dot_dimension_numbers<[1], [0], [0], [1], [0, 0, 1, 1], [], []>} : vector<8x64xf32>, vector<64x256xf32>, vector<8x256xf32> -> vector<8x256xf32>
    %172 = arith.addf %170, %171 : vector<8x256xf32>
    %173 = vector.extract_strided_slice %172 {offsets = [0, 0], sizes = [8, 192], strides = [1, 1]} : vector<8x256xf32> to vector<8x192xf32>
    %174 = arith.negf %173 : vector<8x192xf32>
    %175 = math.exp %174 : vector<8x192xf32>
    %cst_52 = arith.constant 1.000000e+00 : f32
    %176 = vector.broadcast %cst_52 : f32 to vector<8x192xf32>
    %177 = arith.addf %176, %175 : vector<8x192xf32>
    %178 = arith.divf %176, %177 : vector<8x192xf32>
    %179 = vector.extract_strided_slice %172 {offsets = [0, 192], sizes = [8, 64], strides = [1, 1]} : vector<8x256xf32> to vector<8x64xf32>
    %180 = math.tanh %179 : vector<8x64xf32>
    %181 = vector.extract_strided_slice %178 {offsets = [0, 0], sizes = [8, 64], strides = [1, 1]} : vector<8x192xf32> to vector<8x64xf32>
    %182 = vector.extract_strided_slice %178 {offsets = [0, 64], sizes = [8, 64], strides = [1, 1]} : vector<8x192xf32> to vector<8x64xf32>
    %183 = vector.extract_strided_slice %178 {offsets = [0, 128], sizes = [8, 64], strides = [1, 1]} : vector<8x192xf32> to vector<8x64xf32>
    %184 = arith.mulf %182, %155 : vector<8x64xf32>
    %185 = arith.mulf %181, %180 : vector<8x64xf32>
    %186 = arith.addf %184, %185 : vector<8x64xf32>
    %187 = math.tanh %186 : vector<8x64xf32>
    %188 = arith.mulf %183, %187 : vector<8x64xf32>
    %189 = vector.extract_strided_slice %188 {offsets = [0, 0], sizes = [8, 32], strides = [1, 1]} : vector<8x64xf32> to vector<8x32xf32>
    %190 = arith.index_cast %165 : i32 to index
    %c0_53 = arith.constant 0 : index
    %191 = vector.load %arg8[%190, %c0_53] : memref<64x64xf32, #tpu.memory_space<vmem>>, vector<8x32xf32>
    tpu.vector_store %arg8[%190, %c0_53], %189 {strides = array<i32>} : memref<64x64xf32, #tpu.memory_space<vmem>>, vector<8x32xf32>,
    %192 = vector.extract_strided_slice %188 {offsets = [0, 32], sizes = [8, 32], strides = [1, 1]} : vector<8x64xf32> to vector<8x32xf32>
    %193 = arith.index_cast %168 : i32 to index
    %c32_54 = arith.constant 32 : index
    %194 = vector.load %arg8[%193, %c32_54] : memref<64x64xf32, #tpu.memory_space<vmem>>, vector<8x32xf32>
    tpu.vector_store %arg8[%193, %c32_54], %192 {strides = array<i32>} : memref<64x64xf32, #tpu.memory_space<vmem>>, vector<8x32xf32>,
    %c6_i32 = arith.constant 6 : i32
    %c8_i32_55 = arith.constant 8 : i32
    %195 = arith.muli %c6_i32, %c8_i32_55 : i32
    %196 = tpu.assume_multiple %195, 8 : i32
    %c7_i32_56 = arith.constant 7 : i32
    %197 = arith.subi %c7_i32_56, %c6_i32 : i32
    %c8_i32_57 = arith.constant 8 : i32
    %198 = arith.muli %197, %c8_i32_57 : i32
    %199 = tpu.assume_multiple %198, 8 : i32
    %200 = arith.index_cast %196 : i32 to index
    %c0_58 = arith.constant 0 : index
    %201 = vector.load %arg7[%200, %c0_58] : memref<64x256xf32, #tpu.memory_space<vmem>>, vector<8x256xf32>
    %cst_59 = arith.constant dense<0.000000e+00> : vector<8x256xf32>
    %202 = tpu.matmul %188, %7, %cst_59 {dimension_numbers = #tpu.dot_dimension_numbers<[1], [0], [0], [1], [0, 0, 1, 1], [], []>} : vector<8x64xf32>, vector<64x256xf32>, vector<8x256xf32> -> vector<8x256xf32>
    %203 = arith.addf %201, %202 : vector<8x256xf32>
    %204 = vector.extract_strided_slice %203 {offsets = [0, 0], sizes = [8, 192], strides = [1, 1]} : vector<8x256xf32> to vector<8x192xf32>
    %205 = arith.negf %204 : vector<8x192xf32>
    %206 = math.exp %205 : vector<8x192xf32>
    %cst_60 = arith.constant 1.000000e+00 : f32
    %207 = vector.broadcast %cst_60 : f32 to vector<8x192xf32>
    %208 = arith.addf %207, %206 : vector<8x192xf32>
    %209 = arith.divf %207, %208 : vector<8x192xf32>
    %210 = vector.extract_strided_slice %203 {offsets = [0, 192], sizes = [8, 64], strides = [1, 1]} : vector<8x256xf32> to vector<8x64xf32>
    %211 = math.tanh %210 : vector<8x64xf32>
    %212 = vector.extract_strided_slice %209 {offsets = [0, 0], sizes = [8, 64], strides = [1, 1]} : vector<8x192xf32> to vector<8x64xf32>
    %213 = vector.extract_strided_slice %209 {offsets = [0, 64], sizes = [8, 64], strides = [1, 1]} : vector<8x192xf32> to vector<8x64xf32>
    %214 = vector.extract_strided_slice %209 {offsets = [0, 128], sizes = [8, 64], strides = [1, 1]} : vector<8x192xf32> to vector<8x64xf32>
    %215 = arith.mulf %213, %186 : vector<8x64xf32>
    %216 = arith.mulf %212, %211 : vector<8x64xf32>
    %217 = arith.addf %215, %216 : vector<8x64xf32>
    %218 = math.tanh %217 : vector<8x64xf32>
    %219 = arith.mulf %214, %218 : vector<8x64xf32>
    %220 = vector.extract_strided_slice %219 {offsets = [0, 0], sizes = [8, 32], strides = [1, 1]} : vector<8x64xf32> to vector<8x32xf32>
    %221 = arith.index_cast %196 : i32 to index
    %c0_61 = arith.constant 0 : index
    %222 = vector.load %arg8[%221, %c0_61] : memref<64x64xf32, #tpu.memory_space<vmem>>, vector<8x32xf32>
    tpu.vector_store %arg8[%221, %c0_61], %220 {strides = array<i32>} : memref<64x64xf32, #tpu.memory_space<vmem>>, vector<8x32xf32>,
    %223 = vector.extract_strided_slice %219 {offsets = [0, 32], sizes = [8, 32], strides = [1, 1]} : vector<8x64xf32> to vector<8x32xf32>
    %224 = arith.index_cast %199 : i32 to index
    %c32_62 = arith.constant 32 : index
    %225 = vector.load %arg8[%224, %c32_62] : memref<64x64xf32, #tpu.memory_space<vmem>>, vector<8x32xf32>
    tpu.vector_store %arg8[%224, %c32_62], %223 {strides = array<i32>} : memref<64x64xf32, #tpu.memory_space<vmem>>, vector<8x32xf32>,
    %c7_i32_63 = arith.constant 7 : i32
    %c8_i32_64 = arith.constant 8 : i32
    %226 = arith.muli %c7_i32_63, %c8_i32_64 : i32
    %227 = tpu.assume_multiple %226, 8 : i32
    %c7_i32_65 = arith.constant 7 : i32
    %228 = arith.subi %c7_i32_65, %c7_i32_63 : i32
    %c8_i32_66 = arith.constant 8 : i32
    %229 = arith.muli %228, %c8_i32_66 : i32
    %230 = tpu.assume_multiple %229, 8 : i32
    %231 = arith.index_cast %227 : i32 to index
    %c0_67 = arith.constant 0 : index
    %232 = vector.load %arg7[%231, %c0_67] : memref<64x256xf32, #tpu.memory_space<vmem>>, vector<8x256xf32>
    %cst_68 = arith.constant dense<0.000000e+00> : vector<8x256xf32>
    %233 = tpu.matmul %219, %7, %cst_68 {dimension_numbers = #tpu.dot_dimension_numbers<[1], [0], [0], [1], [0, 0, 1, 1], [], []>} : vector<8x64xf32>, vector<64x256xf32>, vector<8x256xf32> -> vector<8x256xf32>
    %234 = arith.addf %232, %233 : vector<8x256xf32>
    %235 = vector.extract_strided_slice %234 {offsets = [0, 0], sizes = [8, 192], strides = [1, 1]} : vector<8x256xf32> to vector<8x192xf32>
    %236 = arith.negf %235 : vector<8x192xf32>
    %237 = math.exp %236 : vector<8x192xf32>
    %cst_69 = arith.constant 1.000000e+00 : f32
    %238 = vector.broadcast %cst_69 : f32 to vector<8x192xf32>
    %239 = arith.addf %238, %237 : vector<8x192xf32>
    %240 = arith.divf %238, %239 : vector<8x192xf32>
    %241 = vector.extract_strided_slice %234 {offsets = [0, 192], sizes = [8, 64], strides = [1, 1]} : vector<8x256xf32> to vector<8x64xf32>
    %242 = math.tanh %241 : vector<8x64xf32>
    %243 = vector.extract_strided_slice %240 {offsets = [0, 0], sizes = [8, 64], strides = [1, 1]} : vector<8x192xf32> to vector<8x64xf32>
    %244 = vector.extract_strided_slice %240 {offsets = [0, 64], sizes = [8, 64], strides = [1, 1]} : vector<8x192xf32> to vector<8x64xf32>
    %245 = vector.extract_strided_slice %240 {offsets = [0, 128], sizes = [8, 64], strides = [1, 1]} : vector<8x192xf32> to vector<8x64xf32>
    %246 = arith.mulf %244, %217 : vector<8x64xf32>
    %247 = arith.mulf %243, %242 : vector<8x64xf32>
    %248 = arith.addf %246, %247 : vector<8x64xf32>
    %249 = math.tanh %248 : vector<8x64xf32>
    %250 = arith.mulf %245, %249 : vector<8x64xf32>
    %251 = vector.extract_strided_slice %250 {offsets = [0, 0], sizes = [8, 32], strides = [1, 1]} : vector<8x64xf32> to vector<8x32xf32>
    %252 = arith.index_cast %227 : i32 to index
    %c0_70 = arith.constant 0 : index
    %253 = vector.load %arg8[%252, %c0_70] : memref<64x64xf32, #tpu.memory_space<vmem>>, vector<8x32xf32>
    tpu.vector_store %arg8[%252, %c0_70], %251 {strides = array<i32>} : memref<64x64xf32, #tpu.memory_space<vmem>>, vector<8x32xf32>,
    %254 = vector.extract_strided_slice %250 {offsets = [0, 32], sizes = [8, 32], strides = [1, 1]} : vector<8x64xf32> to vector<8x32xf32>
    %255 = arith.index_cast %230 : i32 to index
    %c32_71 = arith.constant 32 : index
    %256 = vector.load %arg8[%255, %c32_71] : memref<64x64xf32, #tpu.memory_space<vmem>>, vector<8x32xf32>
    tpu.vector_store %arg8[%255, %c32_71], %254 {strides = array<i32>} : memref<64x64xf32, #tpu.memory_space<vmem>>, vector<8x32xf32>,
    %c8_i32_72 = arith.constant 8 : i32
    %c0_73 = arith.constant 0 : index
    %c0_74 = arith.constant 0 : index
    %257 = vector.load %arg8[%c0_73, %c0_74] : memref<64x64xf32, #tpu.memory_space<vmem>>, vector<64x64xf32>
    %c0_75 = arith.constant 0 : index
    %c0_76 = arith.constant 0 : index
    %258 = vector.load %arg4[%c0_75, %c0_76] : memref<64x128xf32, #tpu.memory_space<vmem>>, vector<64x128xf32>
    %cst_77 = arith.constant dense<0.000000e+00> : vector<64x128xf32>
    %259 = tpu.matmul %257, %258, %cst_77 {dimension_numbers = #tpu.dot_dimension_numbers<[1], [0], [0], [1], [0, 0, 1, 1], [], []>} : vector<64x64xf32>, vector<64x128xf32>, vector<64x128xf32> -> vector<64x128xf32>
    %c0_78 = arith.constant 0 : index
    %c0_79 = arith.constant 0 : index
    %260 = vector.load %arg5[%c0_78, %c0_79] : memref<1x128xf32, #tpu.memory_space<vmem>>, vector<1x128xf32>
    %261 = vector.broadcast %260 : vector<1x128xf32> to vector<64x128xf32>
    %262 = arith.addf %259, %261 : vector<64x128xf32>
    %c0_80 = arith.constant 0 : index
    %c0_81 = arith.constant 0 : index
    %263 = vector.load %arg6[%c0_80, %c0_81] : memref<64x128xf32, #tpu.memory_space<vmem>>, vector<64x128xf32>
    tpu.vector_store %arg6[%c0_80, %c0_81], %262 {strides = array<i32>} : memref<64x128xf32, #tpu.memory_space<vmem>>, vector<64x128xf32>,
    return
  }
}

</mosaic_0001>

<llo_original>
// kernel: tpu_custom_call.1
$region0: #{tpu_custom_call.1}
  #allocation0 [shape = 'u32[]', space=smem, size = 0x4, offset = 0x4, fixed_abs, tag = 'smem constant byte address 0x4 - core index']
  #allocation1 [shape = 'u32[72,128]{1,0:T(1,128)}', space=vmem, size = 0x9000, scoped, tag = 'internal scratch']
  #allocation2 [shape = 'f32[64,256]{1,0:T(8,128)}', space=vmem, size = 0x10000, scoped, tag = 'scratch operand']
  #allocation3 [shape = 'f32[64,64]{1,0:T(8,128)}', space=vmem, size = 0x8000, scoped, tag = 'scratch operand']
  %s0 = inlined_call_operand.vmem [shape: f32[64,32], index: 0, kind: input, shape index: {}]
  %s1 = inlined_call_operand.vmem [shape: f32[32,256], index: 1, kind: input, shape index: {}]
  %s2 = inlined_call_operand.hbm [shape: f32[64,256], index: 2, kind: input, shape index: {}]
  %s3 = inlined_call_operand.vmem [shape: f32[1,256], index: 3, kind: input, shape index: {}]
  %s4 = inlined_call_operand.hbm [shape: f32[64,128], index: 4, kind: input, shape index: {}]
  %s5 = inlined_call_operand.vmem [shape: f32[1,128], index: 5, kind: input, shape index: {}]
  %s6 = inlined_call_operand.hbm [shape: f32[64,128], index: 6, kind: output, shape index: {}]
  %s7 = sld [smem:[#allocation0]]
  $region42: #{tpu_custom_call.1} parent=0
    _
  %s9 = ssub.s32 1, %s7
  %s10 = scalar_select 0, %s9, %s7
  $region1: #{tpu_custom_call.1} parent=0
    #allocation4 [shape = 'u8[65536]{0}', space=vmem, size = 0x10000, scoped, tag = 'input window, operand 2, single buffered']
    #allocation5 [shape = 's32[1]{0}', space=sflag, size = 0x4, scoped, tag = 'scoped memory for tpu_custom_call.1']
    #allocation6 [shape = 's32[1]{0}', space=sflag, size = 0x4, scoped, tag = 'scoped memory for tpu_custom_call.1']
    #allocation7 [shape = 'u8[32768]{0}', space=vmem, size = 0x8000, scoped, tag = 'input window, operand 4, single buffered']
    #allocation8 [shape = 's32[1]{0}', space=sflag, size = 0x4, scoped, tag = 'scoped memory for tpu_custom_call.1']
    #allocation9 [shape = 'u8[32768]{0}', space=vmem, size = 0x8000, scoped, tag = 'output window, operand 0, single buffered']
    %11 = vsyncpa [#allocation5], 0
    %12 = vsyncpa [#allocation8], 0
    %13 = vsyncpa [#allocation6], 0
    // Predicated region
    $region2: #{tpu_custom_call.1} parent=1 // pred_check
      _
    $region3: #{tpu_custom_call.1} parent=1 // pred_check_branch
      %15 = sbr.rel (0) target = $region5
    $region4: #{tpu_custom_call.1} parent=1 // pred_region
      _
    $region5: #{tpu_custom_call.1} parent=1 // pred_fallthru
      _
    // Predicated region
    $region6: #{tpu_custom_call.1} parent=1 // pred_check
      _
    $region7: #{tpu_custom_call.1} parent=1 // pred_check_branch
      %17 = sbr.rel (0) target = $region9
    $region8: #{tpu_custom_call.1} parent=1 // pred_region
      _
    $region9: #{tpu_custom_call.1} parent=1 // pred_fallthru
      _
    // Predicated region
    $region10: #{tpu_custom_call.1} parent=1 // pred_check
      _
    $region11: #{tpu_custom_call.1} parent=1 // pred_check_branch
      %19 = sbr.rel (0) target = $region13
    $region12: #{tpu_custom_call.1} parent=1 // pred_region
      %21 = vsyncadd [#allocation5], 0
      %s22 = sshll.u32 %s2, 4
      %s23 = int_to_ptr.hbm [resolvable:$true] %s22
      %s24 = sshll.u32 [#allocation4], 4
      %s25 = int_to_ptr.vmem [resolvable:$true] %s24
      %30 = dma.hbm_to_vmem [thread:$0]  %s23, 2048, %s25, [#allocation5], 256, 256, 16
    $region13: #{tpu_custom_call.1} parent=1 // pred_fallthru
      _
    // Predicated region
    $region14: #{tpu_custom_call.1} parent=1 // pred_check
      _
    $region15: #{tpu_custom_call.1} parent=1 // pred_check_branch
      %32 = sbr.rel (0) target = $region17
    $region16: #{tpu_custom_call.1} parent=1 // pred_region
      _
    $region17: #{tpu_custom_call.1} parent=1 // pred_fallthru
      _
    // Predicated region
    $region18: #{tpu_custom_call.1} parent=1 // pred_check
      _
    $region19: #{tpu_custom_call.1} parent=1 // pred_check_branch
      %34 = sbr.rel (0) target = $region21
    $region20: #{tpu_custom_call.1} parent=1 // pred_region
      %36 = vsyncadd [#allocation8], 0
      %s37 = sshll.u32 %s4, 4
      %s38 = int_to_ptr.hbm [resolvable:$true] %s37
      %s39 = sshll.u32 [#allocation7], 4
      %s40 = int_to_ptr.vmem [resolvable:$true] %s39
      %45 = dma.hbm_to_vmem [thread:$0]  %s38, 1024, %s40, [#allocation8], 128, 128, 8
    $region21: #{tpu_custom_call.1} parent=1 // pred_fallthru
      _
    // Predicated region
    $region22: #{tpu_custom_call.1} parent=1 // pred_check
      _
    $region23: #{tpu_custom_call.1} parent=1 // pred_check_branch
      %47 = sbr.rel (0) target = $region25
    $region24: #{tpu_custom_call.1} parent=1 // pred_region
      _
    $region25: #{tpu_custom_call.1} parent=1 // pred_fallthru
      _
    // Predicated region
    $region26: #{tpu_custom_call.1} parent=1 // pred_check
      _
    $region27: #{tpu_custom_call.1} parent=1 // pred_check_branch
      %49 = sbr.rel (0) target = $region29
    $region28: #{tpu_custom_call.1} parent=1 // pred_region
      %51 = dma.done [#allocation5], 2048
    $region29: #{tpu_custom_call.1} parent=1 // pred_fallthru
      _
    // Predicated region
    $region30: #{tpu_custom_call.1} parent=1 // pred_check
      _
    $region31: #{tpu_custom_call.1} parent=1 // pred_check_branch
      %53 = sbr.rel (0) target = $region33
    $region32: #{tpu_custom_call.1} parent=1 // pred_region
      %55 = dma.done [#allocation8], 1024
    $region33: #{tpu_custom_call.1} parent=1 // pred_fallthru
      _
    %v56 = vld [vmem:[%s0] sm:$0xff]
    %v57 = vld [vmem:[%s0 + $0x8] sm:$0xff]
    %v58 = vld [vmem:[%s0 + $0x10] sm:$0xff]
    %v59 = vld [vmem:[%s0 + $0x18] sm:$0xff]
    %v60 = vld [vmem:[%s0 + $0x20] sm:$0xff]
    %v61 = vld [vmem:[%s0 + $0x28] sm:$0xff]
    %v62 = vld [vmem:[%s0 + $0x30] sm:$0xff]
    %v63 = vld [vmem:[%s0 + $0x38] sm:$0xff]
    %v64 = vld [vmem:[%s1] sm:$0xff]
    %v65 = vld [vmem:[%s1 + $0x8] sm:$0xff]
    %v66 = vld [vmem:[%s1 + $0x10] sm:$0xff]
    %v67 = vld [vmem:[%s1 + $0x18] sm:$0xff]
    %v68 = vld [vmem:[%s1 + $0x20] sm:$0xff]
    %v69 = vld [vmem:[%s1 + $0x28] sm:$0xff]
    %v70 = vld [vmem:[%s1 + $0x30] sm:$0xff]
    %v71 = vld [vmem:[%s1 + $0x38] sm:$0xff]
    %v72 = vld [vmem:[%s3] sm:$0x3]
    %v74 = vperm.slane %v72, 0
    %v75 = vperm.slane %v72, 1
    %vm78 = vcmask 261120
    %v80 = vsel %vm78, %v56, 0
    %v83 = vsel %vm78, %v57, 0
    %v86 = vsel %vm78, %v58, 0
    %v89 = vsel %vm78, %v59, 0
    %v92 = vsel %vm78, %v60, 0
    %v95 = vsel %vm78, %v61, 0
    %v98 = vsel %vm78, %v62, 0
    %v101 = vsel %vm78, %v63, 0
    %103 = vmatpush.msra.mxu0 0.0
    %104 = vmatpush.msra.mxu0 0.0
    %105 = vmatpush.msra.mxu0 0.0
    %106 = vmatpush.msra.mxu0 0.0
    %107 = vmatpush.msra.mxu0 0.0
    %108 = vmatpush.msra.mxu0 0.0
    %109 = vmatpush.msra.mxu0 0.0
    %110 = vmatpush.msra.mxu0 0.0
    %111 = vmatpush.msra.mxu0 0.0
    %112 = vmatpush.msra.mxu0 0.0
    %113 = vmatpush.msra.mxu0 0.0
    %114 = vmatpush.msra.mxu0 0.0
    %115 = vmatpush.msra.mxu0 %v70
    %116 = vmatpush.msra.mxu0 %v68
    %117 = vmatpush.msra.mxu0 %v66
    %118 = vmatpush.msra.mxu0 %v64
    %119 = vmatmul.f32.gmra.mxu0 %v80
    %v120 = vpop.f32.mrf.mxu0
    %v121 = vadd.f32 %v74, %v120
    %122 = vmatmul.f32.gmra.mxu0 %v83
    %v123 = vpop.f32.mrf.mxu0
    %v124 = vadd.f32 %v74, %v123
    %125 = vmatmul.f32.gmra.mxu0 %v86
    %v126 = vpop.f32.mrf.mxu0
    %v127 = vadd.f32 %v74, %v126
    %128 = vmatmul.f32.gmra.mxu0 %v89
    %v129 = vpop.f32.mrf.mxu0
    %v130 = vadd.f32 %v74, %v129
    %131 = vmatmul.f32.gmra.mxu0 %v92
    %v132 = vpop.f32.mrf.mxu0
    %v133 = vadd.f32 %v74, %v132
    %134 = vmatmul.f32.gmra.mxu0 %v95
    %v135 = vpop.f32.mrf.mxu0
    %v136 = vadd.f32 %v74, %v135
    %137 = vmatmul.f32.gmra.mxu0 %v98
    %v138 = vpop.f32.mrf.mxu0
    %v139 = vadd.f32 %v74, %v138
    %140 = vmatmul.f32.gmra.mxu0 %v101
    %v141 = vpop.f32.mrf.mxu0
    %v142 = vadd.f32 %v74, %v141
    %143 = vdwg.mxu0
    %144 = vmatpush.msra.mxu0 0.0
    %145 = vmatpush.msra.mxu0 0.0
    %146 = vmatpush.msra.mxu0 0.0
    %147 = vmatpush.msra.mxu0 0.0
    %148 = vmatpush.msra.mxu0 0.0
    %149 = vmatpush.msra.mxu0 0.0
    %150 = vmatpush.msra.mxu0 0.0
    %151 = vmatpush.msra.mxu0 0.0
    %152 = vmatpush.msra.mxu0 0.0
    %153 = vmatpush.msra.mxu0 0.0
    %154 = vmatpush.msra.mxu0 0.0
    %155 = vmatpush.msra.mxu0 0.0
    %156 = vmatpush.msra.mxu0 %v71
    %157 = vmatpush.msra.mxu0 %v69
    %158 = vmatpush.msra.mxu0 %v67
    %159 = vmatpush.msra.mxu0 %v65
    %160 = vmatmul.f32.gmra.mxu0 %v80
    %v161 = vpop.f32.mrf.mxu0
    %v162 = vadd.f32 %v75, %v161
    %163 = vmatmul.f32.gmra.mxu0 %v83
    %v164 = vpop.f32.mrf.mxu0
    %v165 = vadd.f32 %v75, %v164
    %166 = vmatmul.f32.gmra.mxu0 %v86
    %v167 = vpop.f32.mrf.mxu0
    %v168 = vadd.f32 %v75, %v167
    %169 = vmatmul.f32.gmra.mxu0 %v89
    %v170 = vpop.f32.mrf.mxu0
    %v171 = vadd.f32 %v75, %v170
    %172 = vmatmul.f32.gmra.mxu0 %v92
    %v173 = vpop.f32.mrf.mxu0
    %v174 = vadd.f32 %v75, %v173
    %175 = vmatmul.f32.gmra.mxu0 %v95
    %v176 = vpop.f32.mrf.mxu0
    %v177 = vadd.f32 %v75, %v176
    %178 = vmatmul.f32.gmra.mxu0 %v98
    %v179 = vpop.f32.mrf.mxu0
    %v180 = vadd.f32 %v75, %v179
    %181 = vmatmul.f32.gmra.mxu0 %v101
    %v182 = vpop.f32.mrf.mxu0
    %v183 = vadd.f32 %v75, %v182
    %184 = vdwg.mxu0
    %185 = vst [vmem:[#allocation2] sm:$0xff] %v121
    %186 = vst [vmem:[#allocation2 + $0x8] sm:$0xff] %v162
    %187 = vst [vmem:[#allocation2 + $0x10] sm:$0xff] %v124
    %188 = vst [vmem:[#allocation2 + $0x18] sm:$0xff] %v165
    %189 = vst [vmem:[#allocation2 + $0x20] sm:$0xff] %v127
    %190 = vst [vmem:[#allocation2 + $0x28] sm:$0xff] %v168
    %191 = vst [vmem:[#allocation2 + $0x30] sm:$0xff] %v130
    %192 = vst [vmem:[#allocation2 + $0x38] sm:$0xff] %v171
    %193 = vst [vmem:[#allocation2 + $0x40] sm:$0xff] %v133
    %194 = vst [vmem:[#allocation2 + $0x48] sm:$0xff] %v174
    %195 = vst [vmem:[#allocation2 + $0x50] sm:$0xff] %v136
    %196 = vst [vmem:[#allocation2 + $0x58] sm:$0xff] %v177
    %197 = vst [vmem:[#allocation2 + $0x60] sm:$0xff] %v139
    %198 = vst [vmem:[#allocation2 + $0x68] sm:$0xff] %v180
    %199 = vst [vmem:[#allocation2 + $0x70] sm:$0xff] %v142
    %200 = vst [vmem:[#allocation2 + $0x78] sm:$0xff] %v183
    %v201 = vld [vmem:[#allocation4] sm:$0xff]
    %v202 = vld [vmem:[#allocation4 + $0x8] sm:$0xff]
    %v203 = vld [vmem:[#allocation4 + $0x10] sm:$0xff]
    %v204 = vld [vmem:[#allocation4 + $0x18] sm:$0xff]
    %v205 = vld [vmem:[#allocation4 + $0x20] sm:$0xff]
    %v206 = vld [vmem:[#allocation4 + $0x28] sm:$0xff]
    %v207 = vld [vmem:[#allocation4 + $0x30] sm:$0xff]
    %v208 = vld [vmem:[#allocation4 + $0x38] sm:$0xff]
    %v209 = vld [vmem:[#allocation4 + $0x40] sm:$0xff]
    %v210 = vld [vmem:[#allocation4 + $0x48] sm:$0xff]
    %v211 = vld [vmem:[#allocation4 + $0x50] sm:$0xff]
    %v212 = vld [vmem:[#allocation4 + $0x58] sm:$0xff]
    %v213 = vld [vmem:[#allocation4 + $0x60] sm:$0xff]
    %v214 = vld [vmem:[#allocation4 + $0x68] sm:$0xff]
    %v215 = vld [vmem:[#allocation4 + $0x70] sm:$0xff]
    %v216 = vld [vmem:[#allocation4 + $0x78] sm:$0xff]
    %s217 = smul.u32 0, 2
    %s218 = smul.addr %s217, 8
    %s219 = scalar_lea.vmem [#allocation2], %s218
    %v220 = vld [vmem:[%s219] sm:$0xff]
    %v221 = vld [vmem:[%s219 + $0x8] sm:$0xff]
    %vm222 = vcmask 523264
    %v224 = vsel %vm222, 0.0, 0
    %226 = vmatpush.msra.mxu0 0.0
    %227 = vmatpush.msra.mxu0 0.0
    %228 = vmatpush.msra.mxu0 0.0
    %229 = vmatpush.msra.mxu0 0.0
    %230 = vmatpush.msra.mxu0 0.0
    %231 = vmatpush.msra.mxu0 0.0
    %232 = vmatpush.msra.mxu0 0.0
    %233 = vmatpush.msra.mxu0 0.0
    %234 = vmatpush.msra.mxu0 %v215
    %235 = vmatpush.msra.mxu0 %v213
    %236 = vmatpush.msra.mxu0 %v211
    %237 = vmatpush.msra.mxu0 %v209
    %238 = vmatpush.msra.mxu0 %v207
    %239 = vmatpush.msra.mxu0 %v205
    %240 = vmatpush.msra.mxu0 %v203
    %241 = vmatpush.msra.mxu0 %v201
    %242 = vmatmul.f32.gmra.mxu0 %v224
    %v243 = vpop.f32.mrf.mxu0
    %v244 = vadd.f32 0.0, %v243
    %245 = vdwg.mxu0
    %246 = vmatpush.msra.mxu0 0.0
    %247 = vmatpush.msra.mxu0 0.0
    %248 = vmatpush.msra.mxu0 0.0
    %249 = vmatpush.msra.mxu0 0.0
    %250 = vmatpush.msra.mxu0 0.0
    %251 = vmatpush.msra.mxu0 0.0
    %252 = vmatpush.msra.mxu0 0.0
    %253 = vmatpush.msra.mxu0 0.0
    %254 = vmatpush.msra.mxu0 %v216
    %255 = vmatpush.msra.mxu0 %v214
    %256 = vmatpush.msra.mxu0 %v212
    %257 = vmatpush.msra.mxu0 %v210
    %258 = vmatpush.msra.mxu0 %v208
    %259 = vmatpush.msra.mxu0 %v206
    %260 = vmatpush.msra.mxu0 %v204
    %261 = vmatpush.msra.mxu0 %v202
    %262 = vmatmul.f32.gmra.mxu0 %v224
    %v263 = vpop.f32.mrf.mxu0
    %v264 = vadd.f32 0.0, %v263
    %265 = vdwg.mxu0
    %v266 = vadd.f32 %v220, %v244
    %v267 = vadd.f32 %v221, %v264
    %v268 = vxor.u32 %v266, 2147483648
    %v269 = vxor.u32 %v267, 2147483648
    %v270 = vmul.f32 %v268, 1.442695
    %v271 = vpow.pop %v270
    %v272 = vmul.f32 %v269, 1.442695
    %v273 = vpow.pop %v272
    %v274 = vadd.f32 %v271, 1.0
    %v275 = vadd.f32 %v273, 1.0
    %v276 = vrcp.pop %v274
    %v277 = vmul.f32 %v274, %v276
    %v278 = vsub.f32 1.0, %v277
    %v279 = vmul.f32 %v276, %v278
    %v280 = vadd.f32 %v276, %v279
    %vm281 = vweird.f32 %v274
    %vm282 = vweird.f32 %v276
    %vm283 = vmor %vm281, %vm282
    %v284 = vsel %vm283, %v276, %v280
    %v285 = vand.u32 2147483647, %v274
    %vm286 = vcmp.eq.f32.partialorder %v285, 8.507059e+37
    %v287 = vand.u32 %v274, 2147483648
    %v288 = vor.u32 1.1754944e-38, %v287
    %v289 = vsel %vm286, %v288, %v284
    %v290 = vmul.f32 1.0, %v289
    %v291 = vrcp.pop %v275
    %v292 = vmul.f32 %v275, %v291
    %v293 = vsub.f32 1.0, %v292
    %v294 = vmul.f32 %v291, %v293
    %v295 = vadd.f32 %v291, %v294
    %vm296 = vweird.f32 %v275
    %vm297 = vweird.f32 %v291
    %vm298 = vmor %vm296, %vm297
    %v299 = vsel %vm298, %v291, %v295
    %v300 = vand.u32 2147483647, %v275
    %vm301 = vcmp.eq.f32.partialorder %v300, 8.507059e+37
    %v302 = vand.u32 %v275, 2147483648
    %v303 = vor.u32 1.1754944e-38, %v302
    %v304 = vsel %vm301, %v303, %v299
    %v305 = vmul.f32 1.0, %v304
    %v306 = vtanh.pop %v267
    %v307 = vmul.f32 %v290, 0.0
    %309 = vrot.lane.b32.xlu0 %v306, 64
    %v310 = vpop.permute.xlu0 %309
    %v312 = vmul.f32 %v290, %v310
    %314 = vrot.lane.b32.xlu0 %v312, 64
    %v315 = vpop.permute.xlu0 %314
    %v317 = vadd.f32 %v307, %v315
    %v318 = vtanh.pop %v317
    %320 = vrot.lane.b32.xlu0 %v318, 64
    %v321 = vpop.permute.xlu0 %320
    %v323 = vmul.f32 %v305, %v321
    %324 = vst.msk [vmem:[#allocation3] sm:$0xff] %vm78, %v323
    %s325 = scalar_lea.vmem [#allocation3], 56
    %vm326 = vcmask 523520
    %327 = vst.msk [vmem:[%s325] sm:$0xff] %vm326, %v323
    %s328 = smul.u32 1, 2
    %s329 = smul.addr %s328, 8
    %s330 = scalar_lea.vmem [#allocation2], %s329
    %v331 = vld [vmem:[%s330] sm:$0xff]
    %v332 = vld [vmem:[%s330 + $0x8] sm:$0xff]
    %v334 = vsel %vm222, %v323, 0
    %336 = vmatpush.msra.mxu0 0.0
    %337 = vmatpush.msra.mxu0 0.0
    %338 = vmatpush.msra.mxu0 0.0
    %339 = vmatpush.msra.mxu0 0.0
    %340 = vmatpush.msra.mxu0 0.0
    %341 = vmatpush.msra.mxu0 0.0
    %342 = vmatpush.msra.mxu0 0.0
    %343 = vmatpush.msra.mxu0 0.0
    %344 = vmatpush.msra.mxu0 %v215
    %345 = vmatpush.msra.mxu0 %v213
    %346 = vmatpush.msra.mxu0 %v211
    %347 = vmatpush.msra.mxu0 %v209
    %348 = vmatpush.msra.mxu0 %v207
    %349 = vmatpush.msra.mxu0 %v205
    %350 = vmatpush.msra.mxu0 %v203
    %351 = vmatpush.msra.mxu0 %v201
    %352 = vmatmul.f32.gmra.mxu0 %v334
    %v353 = vpop.f32.mrf.mxu0
    %v354 = vadd.f32 0.0, %v353
    %355 = vdwg.mxu0
    %356 = vmatpush.msra.mxu0 0.0
    %357 = vmatpush.msra.mxu0 0.0
    %358 = vmatpush.msra.mxu0 0.0
    %359 = vmatpush.msra.mxu0 0.0
    %360 = vmatpush.msra.mxu0 0.0
    %361 = vmatpush.msra.mxu0 0.0
    %362 = vmatpush.msra.mxu0 0.0
    %363 = vmatpush.msra.mxu0 0.0
    %364 = vmatpush.msra.mxu0 %v216
    %365 = vmatpush.msra.mxu0 %v214
    %366 = vmatpush.msra.mxu0 %v212
    %367 = vmatpush.msra.mxu0 %v210
    %368 = vmatpush.msra.mxu0 %v208
    %369 = vmatpush.msra.mxu0 %v206
    %370 = vmatpush.msra.mxu0 %v204
    %371 = vmatpush.msra.mxu0 %v202
    %372 = vmatmul.f32.gmra.mxu0 %v334
    %v373 = vpop.f32.mrf.mxu0
    %v374 = vadd.f32 0.0, %v373
    %375 = vdwg.mxu0
    %v376 = vadd.f32 %v331, %v354
    %v377 = vadd.f32 %v332, %v374
    %v378 = vxor.u32 %v376, 2147483648
    %v379 = vxor.u32 %v377, 2147483648
    %v380 = vmul.f32 %v378, 1.442695
    %v381 = vpow.pop %v380
    %v382 = vmul.f32 %v379, 1.442695
    %v383 = vpow.pop %v382
    %v384 = vadd.f32 %v381, 1.0
    %v385 = vadd.f32 %v383, 1.0
    %v386 = vrcp.pop %v384
    %v387 = vmul.f32 %v384, %v386
    %v388 = vsub.f32 1.0, %v387
    %v389 = vmul.f32 %v386, %v388
    %v390 = vadd.f32 %v386, %v389
    %vm391 = vweird.f32 %v384
    %vm392 = vweird.f32 %v386
    %vm393 = vmor %vm391, %vm392
    %v394 = vsel %vm393, %v386, %v390
    %v395 = vand.u32 2147483647, %v384
    %vm396 = vcmp.eq.f32.partialorder %v395, 8.507059e+37
    %v397 = vand.u32 %v384, 2147483648
    %v398 = vor.u32 1.1754944e-38, %v397
    %v399 = vsel %vm396, %v398, %v394
    %v400 = vmul.f32 1.0, %v399
    %v401 = vrcp.pop %v385
    %v402 = vmul.f32 %v385, %v401
    %v403 = vsub.f32 1.0, %v402
    %v404 = vmul.f32 %v401, %v403
    %v405 = vadd.f32 %v401, %v404
    %vm406 = vweird.f32 %v385
    %vm407 = vweird.f32 %v401
    %vm408 = vmor %vm406, %vm407
    %v409 = vsel %vm408, %v401, %v405
    %v410 = vand.u32 2147483647, %v385
    %vm411 = vcmp.eq.f32.partialorder %v410, 8.507059e+37
    %v412 = vand.u32 %v385, 2147483648
    %v413 = vor.u32 1.1754944e-38, %v412
    %v414 = vsel %vm411, %v413, %v409
    %v415 = vmul.f32 1.0, %v414
    %v416 = vtanh.pop %v377
    %v417 = vmul.f32 %v400, %v317
    %419 = vrot.lane.b32.xlu0 %v416, 64
    %v420 = vpop.permute.xlu0 %419
    %v422 = vmul.f32 %v400, %v420
    %424 = vrot.lane.b32.xlu0 %v422, 64
    %v425 = vpop.permute.xlu0 %424
    %v427 = vadd.f32 %v417, %v425
    %v428 = vtanh.pop %v427
    %430 = vrot.lane.b32.xlu0 %v428, 64
    %v431 = vpop.permute.xlu0 %430
    %v433 = vmul.f32 %v415, %v431
    %s434 = scalar_lea.vmem [#allocation3], 8
    %435 = vst.msk [vmem:[%s434] sm:$0xff] %vm78, %v433
    %s436 = scalar_lea.vmem [#allocation3], 48
    %437 = vst.msk [vmem:[%s436] sm:$0xff] %vm326, %v433
    %s438 = smul.u32 2, 2
    %s439 = smul.addr %s438, 8
    %s440 = scalar_lea.vmem [#allocation2], %s439
    %v441 = vld [vmem:[%s440] sm:$0xff]
    %v442 = vld [vmem:[%s440 + $0x8] sm:$0xff]
    %v444 = vsel %vm222, %v433, 0
    %446 = vmatpush.msra.mxu0 0.0
    %447 = vmatpush.msra.mxu0 0.0
    %448 = vmatpush.msra.mxu0 0.0
    %449 = vmatpush.msra.mxu0 0.0
    %450 = vmatpush.msra.mxu0 0.0
    %451 = vmatpush.msra.mxu0 0.0
    %452 = vmatpush.msra.mxu0 0.0
    %453 = vmatpush.msra.mxu0 0.0
    %454 = vmatpush.msra.mxu0 %v215
    %455 = vmatpush.msra.mxu0 %v213
    %456 = vmatpush.msra.mxu0 %v211
    %457 = vmatpush.msra.mxu0 %v209
    %458 = vmatpush.msra.mxu0 %v207
    %459 = vmatpush.msra.mxu0 %v205
    %460 = vmatpush.msra.mxu0 %v203
    %461 = vmatpush.msra.mxu0 %v201
    %462 = vmatmul.f32.gmra.mxu0 %v444
    %v463 = vpop.f32.mrf.mxu0
    %v464 = vadd.f32 0.0, %v463
    %465 = vdwg.mxu0
    %466 = vmatpush.msra.mxu0 0.0
    %467 = vmatpush.msra.mxu0 0.0
    %468 = vmatpush.msra.mxu0 0.0
    %469 = vmatpush.msra.mxu0 0.0
    %470 = vmatpush.msra.mxu0 0.0
    %471 = vmatpush.msra.mxu0 0.0
    %472 = vmatpush.msra.mxu0 0.0
    %473 = vmatpush.msra.mxu0 0.0
    %474 = vmatpush.msra.mxu0 %v216
    %475 = vmatpush.msra.mxu0 %v214
    %476 = vmatpush.msra.mxu0 %v212
    %477 = vmatpush.msra.mxu0 %v210
    %478 = vmatpush.msra.mxu0 %v208
    %479 = vmatpush.msra.mxu0 %v206
    %480 = vmatpush.msra.mxu0 %v204
    %481 = vmatpush.msra.mxu0 %v202
    %482 = vmatmul.f32.gmra.mxu0 %v444
    %v483 = vpop.f32.mrf.mxu0
    %v484 = vadd.f32 0.0, %v483
    %485 = vdwg.mxu0
    %v486 = vadd.f32 %v441, %v464
    %v487 = vadd.f32 %v442, %v484
    %v488 = vxor.u32 %v486, 2147483648
    %v489 = vxor.u32 %v487, 2147483648
    %v490 = vmul.f32 %v488, 1.442695
    %v491 = vpow.pop %v490
    %v492 = vmul.f32 %v489, 1.442695
    %v493 = vpow.pop %v492
    %v494 = vadd.f32 %v491, 1.0
    %v495 = vadd.f32 %v493, 1.0
    %v496 = vrcp.pop %v494
    %v497 = vmul.f32 %v494, %v496
    %v498 = vsub.f32 1.0, %v497
    %v499 = vmul.f32 %v496, %v498
    %v500 = vadd.f32 %v496, %v499
    %vm501 = vweird.f32 %v494
    %vm502 = vweird.f32 %v496
    %vm503 = vmor %vm501, %vm502
    %v504 = vsel %vm503, %v496, %v500
    %v505 = vand.u32 2147483647, %v494
    %vm506 = vcmp.eq.f32.partialorder %v505, 8.507059e+37
    %v507 = vand.u32 %v494, 2147483648
    %v508 = vor.u32 1.1754944e-38, %v507
    %v509 = vsel %vm506, %v508, %v504
    %v510 = vmul.f32 1.0, %v509
    %v511 = vrcp.pop %v495
    %v512 = vmul.f32 %v495, %v511
    %v513 = vsub.f32 1.0, %v512
    %v514 = vmul.f32 %v511, %v513
    %v515 = vadd.f32 %v511, %v514
    %vm516 = vweird.f32 %v495
    %vm517 = vweird.f32 %v511
    %vm518 = vmor %vm516, %vm517
    %v519 = vsel %vm518, %v511, %v515
    %v520 = vand.u32 2147483647, %v495
    %vm521 = vcmp.eq.f32.partialorder %v520, 8.507059e+37
    %v522 = vand.u32 %v495, 2147483648
    %v523 = vor.u32 1.1754944e-38, %v522
    %v524 = vsel %vm521, %v523, %v519
    %v525 = vmul.f32 1.0, %v524
    %v526 = vtanh.pop %v487
    %v527 = vmul.f32 %v510, %v427
    %529 = vrot.lane.b32.xlu0 %v526, 64
    %v530 = vpop.permute.xlu0 %529
    %v532 = vmul.f32 %v510, %v530
    %534 = vrot.lane.b32.xlu0 %v532, 64
    %v535 = vpop.permute.xlu0 %534
    %v537 = vadd.f32 %v527, %v535
    %v538 = vtanh.pop %v537
    %540 = vrot.lane.b32.xlu0 %v538, 64
    %v541 = vpop.permute.xlu0 %540
    %v543 = vmul.f32 %v525, %v541
    %s544 = scalar_lea.vmem [#allocation3], 16
    %545 = vst.msk [vmem:[%s544] sm:$0xff] %vm78, %v543
    %s546 = scalar_lea.vmem [#allocation3], 40
    %547 = vst.msk [vmem:[%s546] sm:$0xff] %vm326, %v543
    %s548 = smul.u32 3, 2
    %s549 = smul.addr %s548, 8
    %s550 = scalar_lea.vmem [#allocation2], %s549
    %v551 = vld [vmem:[%s550] sm:$0xff]
    %v552 = vld [vmem:[%s550 + $0x8] sm:$0xff]
    %v554 = vsel %vm222, %v543, 0
    %556 = vmatpush.msra.mxu0 0.0
    %557 = vmatpush.msra.mxu0 0.0
    %558 = vmatpush.msra.mxu0 0.0
    %559 = vmatpush.msra.mxu0 0.0
    %560 = vmatpush.msra.mxu0 0.0
    %561 = vmatpush.msra.mxu0 0.0
    %562 = vmatpush.msra.mxu0 0.0
    %563 = vmatpush.msra.mxu0 0.0
    %564 = vmatpush.msra.mxu0 %v215
    %565 = vmatpush.msra.mxu0 %v213
    %566 = vmatpush.msra.mxu0 %v211
    %567 = vmatpush.msra.mxu0 %v209
    %568 = vmatpush.msra.mxu0 %v207
    %569 = vmatpush.msra.mxu0 %v205
    %570 = vmatpush.msra.mxu0 %v203
    %571 = vmatpush.msra.mxu0 %v201
    %572 = vmatmul.f32.gmra.mxu0 %v554
    %v573 = vpop.f32.mrf.mxu0
    %v574 = vadd.f32 0.0, %v573
    %575 = vdwg.mxu0
    %576 = vmatpush.msra.mxu0 0.0
    %577 = vmatpush.msra.mxu0 0.0
    %578 = vmatpush.msra.mxu0 0.0
    %579 = vmatpush.msra.mxu0 0.0
    %580 = vmatpush.msra.mxu0 0.0
    %581 = vmatpush.msra.mxu0 0.0
    %582 = vmatpush.msra.mxu0 0.0
    %583 = vmatpush.msra.mxu0 0.0
    %584 = vmatpush.msra.mxu0 %v216
    %585 = vmatpush.msra.mxu0 %v214
    %586 = vmatpush.msra.mxu0 %v212
    %587 = vmatpush.msra.mxu0 %v210
    %588 = vmatpush.msra.mxu0 %v208
    %589 = vmatpush.msra.mxu0 %v206
    %590 = vmatpush.msra.mxu0 %v204
    %591 = vmatpush.msra.mxu0 %v202
    %592 = vmatmul.f32.gmra.mxu0 %v554
    %v593 = vpop.f32.mrf.mxu0
    %v594 = vadd.f32 0.0, %v593
    %595 = vdwg.mxu0
    %v596 = vadd.f32 %v551, %v574
    %v597 = vadd.f32 %v552, %v594
    %v598 = vxor.u32 %v596, 2147483648
    %v599 = vxor.u32 %v597, 2147483648
    %v600 = vmul.f32 %v598, 1.442695
    %v601 = vpow.pop %v600
    %v602 = vmul.f32 %v599, 1.442695
    %v603 = vpow.pop %v602
    %v604 = vadd.f32 %v601, 1.0
    %v605 = vadd.f32 %v603, 1.0
    %v606 = vrcp.pop %v604
    %v607 = vmul.f32 %v604, %v606
    %v608 = vsub.f32 1.0, %v607
    %v609 = vmul.f32 %v606, %v608
    %v610 = vadd.f32 %v606, %v609
    %vm611 = vweird.f32 %v604
    %vm612 = vweird.f32 %v606
    %vm613 = vmor %vm611, %vm612
    %v614 = vsel %vm613, %v606, %v610
    %v615 = vand.u32 2147483647, %v604
    %vm616 = vcmp.eq.f32.partialorder %v615, 8.507059e+37
    %v617 = vand.u32 %v604, 2147483648
    %v618 = vor.u32 1.1754944e-38, %v617
    %v619 = vsel %vm616, %v618, %v614
    %v620 = vmul.f32 1.0, %v619
    %v621 = vrcp.pop %v605
    %v622 = vmul.f32 %v605, %v621
    %v623 = vsub.f32 1.0, %v622
    %v624 = vmul.f32 %v621, %v623
    %v625 = vadd.f32 %v621, %v624
    %vm626 = vweird.f32 %v605
    %vm627 = vweird.f32 %v621
    %vm628 = vmor %vm626, %vm627
    %v629 = vsel %vm628, %v621, %v625
    %v630 = vand.u32 2147483647, %v605
    %vm631 = vcmp.eq.f32.partialorder %v630, 8.507059e+37
    %v632 = vand.u32 %v605, 2147483648
    %v633 = vor.u32 1.1754944e-38, %v632
    %v634 = vsel %vm631, %v633, %v629
    %v635 = vmul.f32 1.0, %v634
    %v636 = vtanh.pop %v597
    %v637 = vmul.f32 %v620, %v537
    %639 = vrot.lane.b32.xlu0 %v636, 64
    %v640 = vpop.permute.xlu0 %639
    %v642 = vmul.f32 %v620, %v640
    %644 = vrot.lane.b32.xlu0 %v642, 64
    %v645 = vpop.permute.xlu0 %644
    %v647 = vadd.f32 %v637, %v645
    %v648 = vtanh.pop %v647
    %650 = vrot.lane.b32.xlu0 %v648, 64
    %v651 = vpop.permute.xlu0 %650
    %v653 = vmul.f32 %v635, %v651
    %s654 = scalar_lea.vmem [#allocation3], 24
    %655 = vst.msk [vmem:[%s654] sm:$0xff] %vm78, %v653
    %s656 = scalar_lea.vmem [#allocation3], 32
    %657 = vst.msk [vmem:[%s656] sm:$0xff] %vm326, %v653
    %s658 = smul.u32 4, 2
    %s659 = smul.addr %s658, 8
    %s660 = scalar_lea.vmem [#allocation2], %s659
    %v661 = vld [vmem:[%s660] sm:$0xff]
    %v662 = vld [vmem:[%s660 + $0x8] sm:$0xff]
    %v664 = vsel %vm222, %v653, 0
    %666 = vmatpush.msra.mxu0 0.0
    %667 = vmatpush.msra.mxu0 0.0
    %668 = vmatpush.msra.mxu0 0.0
    %669 = vmatpush.msra.mxu0 0.0
    %670 = vmatpush.msra.mxu0 0.0
    %671 = vmatpush.msra.mxu0 0.0
    %672 = vmatpush.msra.mxu0 0.0
    %673 = vmatpush.msra.mxu0 0.0
    %674 = vmatpush.msra.mxu0 %v215
    %675 = vmatpush.msra.mxu0 %v213
    %676 = vmatpush.msra.mxu0 %v211
    %677 = vmatpush.msra.mxu0 %v209
    %678 = vmatpush.msra.mxu0 %v207
    %679 = vmatpush.msra.mxu0 %v205
    %680 = vmatpush.msra.mxu0 %v203
    %681 = vmatpush.msra.mxu0 %v201
    %682 = vmatmul.f32.gmra.mxu0 %v664
    %v683 = vpop.f32.mrf.mxu0
    %v684 = vadd.f32 0.0, %v683
    %685 = vdwg.mxu0
    %686 = vmatpush.msra.mxu0 0.0
    %687 = vmatpush.msra.mxu0 0.0
    %688 = vmatpush.msra.mxu0 0.0
    %689 = vmatpush.msra.mxu0 0.0
    %690 = vmatpush.msra.mxu0 0.0
    %691 = vmatpush.msra.mxu0 0.0
    %692 = vmatpush.msra.mxu0 0.0
    %693 = vmatpush.msra.mxu0 0.0
    %694 = vmatpush.msra.mxu0 %v216
    %695 = vmatpush.msra.mxu0 %v214
    %696 = vmatpush.msra.mxu0 %v212
    %697 = vmatpush.msra.mxu0 %v210
    %698 = vmatpush.msra.mxu0 %v208
    %699 = vmatpush.msra.mxu0 %v206
    %700 = vmatpush.msra.mxu0 %v204
    %701 = vmatpush.msra.mxu0 %v202
    %702 = vmatmul.f32.gmra.mxu0 %v664
    %v703 = vpop.f32.mrf.mxu0
    %v704 = vadd.f32 0.0, %v703
    %705 = vdwg.mxu0
    %v706 = vadd.f32 %v661, %v684
    %v707 = vadd.f32 %v662, %v704
    %v708 = vxor.u32 %v706, 2147483648
    %v709 = vxor.u32 %v707, 2147483648
    %v710 = vmul.f32 %v708, 1.442695
    %v711 = vpow.pop %v710
    %v712 = vmul.f32 %v709, 1.442695
    %v713 = vpow.pop %v712
    %v714 = vadd.f32 %v711, 1.0
    %v715 = vadd.f32 %v713, 1.0
    %v716 = vrcp.pop %v714
    %v717 = vmul.f32 %v714, %v716
    %v718 = vsub.f32 1.0, %v717
    %v719 = vmul.f32 %v716, %v718
    %v720 = vadd.f32 %v716, %v719
    %vm721 = vweird.f32 %v714
    %vm722 = vweird.f32 %v716
    %vm723 = vmor %vm721, %vm722
    %v724 = vsel %vm723, %v716, %v720
    %v725 = vand.u32 2147483647, %v714
    %vm726 = vcmp.eq.f32.partialorder %v725, 8.507059e+37
    %v727 = vand.u32 %v714, 2147483648
    %v728 = vor.u32 1.1754944e-38, %v727
    %v729 = vsel %vm726, %v728, %v724
    %v730 = vmul.f32 1.0, %v729
    %v731 = vrcp.pop %v715
    %v732 = vmul.f32 %v715, %v731
    %v733 = vsub.f32 1.0, %v732
    %v734 = vmul.f32 %v731, %v733
    %v735 = vadd.f32 %v731, %v734
    %vm736 = vweird.f32 %v715
    %vm737 = vweird.f32 %v731
    %vm738 = vmor %vm736, %vm737
    %v739 = vsel %vm738, %v731, %v735
    %v740 = vand.u32 2147483647, %v715
    %vm741 = vcmp.eq.f32.partialorder %v740, 8.507059e+37
    %v742 = vand.u32 %v715, 2147483648
    %v743 = vor.u32 1.1754944e-38, %v742
    %v744 = vsel %vm741, %v743, %v739
    %v745 = vmul.f32 1.0, %v744
    %v746 = vtanh.pop %v707
    %v747 = vmul.f32 %v730, %v647
    %749 = vrot.lane.b32.xlu0 %v746, 64
    %v750 = vpop.permute.xlu0 %749
    %v752 = vmul.f32 %v730, %v750
    %754 = vrot.lane.b32.xlu0 %v752, 64
    %v755 = vpop.permute.xlu0 %754
    %v757 = vadd.f32 %v747, %v755
    %v758 = vtanh.pop %v757
    %760 = vrot.lane.b32.xlu0 %v758, 64
    %v761 = vpop.permute.xlu0 %760
    %v763 = vmul.f32 %v745, %v761
    %764 = vst.msk [vmem:[%s656] sm:$0xff] %vm78, %v763
    %765 = vst.msk [vmem:[%s654] sm:$0xff] %vm326, %v763
    %s766 = smul.u32 5, 2
    %s767 = smul.addr %s766, 8
    %s768 = scalar_lea.vmem [#allocation2], %s767
    %v769 = vld [vmem:[%s768] sm:$0xff]
    %v770 = vld [vmem:[%s768 + $0x8] sm:$0xff]
    %v772 = vsel %vm222, %v763, 0
    %774 = vmatpush.msra.mxu0 0.0
    %775 = vmatpush.msra.mxu0 0.0
    %776 = vmatpush.msra.mxu0 0.0
    %777 = vmatpush.msra.mxu0 0.0
    %778 = vmatpush.msra.mxu0 0.0
    %779 = vmatpush.msra.mxu0 0.0
    %780 = vmatpush.msra.mxu0 0.0
    %781 = vmatpush.msra.mxu0 0.0
    %782 = vmatpush.msra.mxu0 %v215
    %783 = vmatpush.msra.mxu0 %v213
    %784 = vmatpush.msra.mxu0 %v211
    %785 = vmatpush.msra.mxu0 %v209
    %786 = vmatpush.msra.mxu0 %v207
    %787 = vmatpush.msra.mxu0 %v205
    %788 = vmatpush.msra.mxu0 %v203
    %789 = vmatpush.msra.mxu0 %v201
    %790 = vmatmul.f32.gmra.mxu0 %v772
    %v791 = vpop.f32.mrf.mxu0
    %v792 = vadd.f32 0.0, %v791
    %793 = vdwg.mxu0
    %794 = vmatpush.msra.mxu0 0.0
    %795 = vmatpush.msra.mxu0 0.0
    %796 = vmatpush.msra.mxu0 0.0
    %797 = vmatpush.msra.mxu0 0.0
    %798 = vmatpush.msra.mxu0 0.0
    %799 = vmatpush.msra.mxu0 0.0
    %800 = vmatpush.msra.mxu0 0.0
    %801 = vmatpush.msra.mxu0 0.0
    %802 = vmatpush.msra.mxu0 %v216
    %803 = vmatpush.msra.mxu0 %v214
    %804 = vmatpush.msra.mxu0 %v212
    %805 = vmatpush.msra.mxu0 %v210
    %806 = vmatpush.msra.mxu0 %v208
    %807 = vmatpush.msra.mxu0 %v206
    %808 = vmatpush.msra.mxu0 %v204
    %809 = vmatpush.msra.mxu0 %v202
    %810 = vmatmul.f32.gmra.mxu0 %v772
    %v811 = vpop.f32.mrf.mxu0
    %v812 = vadd.f32 0.0, %v811
    %813 = vdwg.mxu0
    %v814 = vadd.f32 %v769, %v792
    %v815 = vadd.f32 %v770, %v812
    %v816 = vxor.u32 %v814, 2147483648
    %v817 = vxor.u32 %v815, 2147483648
    %v818 = vmul.f32 %v816, 1.442695
    %v819 = vpow.pop %v818
    %v820 = vmul.f32 %v817, 1.442695
    %v821 = vpow.pop %v820
    %v822 = vadd.f32 %v819, 1.0
    %v823 = vadd.f32 %v821, 1.0
    %v824 = vrcp.pop %v822
    %v825 = vmul.f32 %v822, %v824
    %v826 = vsub.f32 1.0, %v825
    %v827 = vmul.f32 %v824, %v826
    %v828 = vadd.f32 %v824, %v827
    %vm829 = vweird.f32 %v822
    %vm830 = vweird.f32 %v824
    %vm831 = vmor %vm829, %vm830
    %v832 = vsel %vm831, %v824, %v828
    %v833 = vand.u32 2147483647, %v822
    %vm834 = vcmp.eq.f32.partialorder %v833, 8.507059e+37
    %v835 = vand.u32 %v822, 2147483648
    %v836 = vor.u32 1.1754944e-38, %v835
    %v837 = vsel %vm834, %v836, %v832
    %v838 = vmul.f32 1.0, %v837
    %v839 = vrcp.pop %v823
    %v840 = vmul.f32 %v823, %v839
    %v841 = vsub.f32 1.0, %v840
    %v842 = vmul.f32 %v839, %v841
    %v843 = vadd.f32 %v839, %v842
    %vm844 = vweird.f32 %v823
    %vm845 = vweird.f32 %v839
    %vm846 = vmor %vm844, %vm845
    %v847 = vsel %vm846, %v839, %v843
    %v848 = vand.u32 2147483647, %v823
    %vm849 = vcmp.eq.f32.partialorder %v848, 8.507059e+37
    %v850 = vand.u32 %v823, 2147483648
    %v851 = vor.u32 1.1754944e-38, %v850
    %v852 = vsel %vm849, %v851, %v847
    %v853 = vmul.f32 1.0, %v852
    %v854 = vtanh.pop %v815
    %v855 = vmul.f32 %v838, %v757
    %857 = vrot.lane.b32.xlu0 %v854, 64
    %v858 = vpop.permute.xlu0 %857
    %v860 = vmul.f32 %v838, %v858
    %862 = vrot.lane.b32.xlu0 %v860, 64
    %v863 = vpop.permute.xlu0 %862
    %v865 = vadd.f32 %v855, %v863
    %v866 = vtanh.pop %v865
    %868 = vrot.lane.b32.xlu0 %v866, 64
    %v869 = vpop.permute.xlu0 %868
    %v871 = vmul.f32 %v853, %v869
    %872 = vst.msk [vmem:[%s546] sm:$0xff] %vm78, %v871
    %873 = vst.msk [vmem:[%s544] sm:$0xff] %vm326, %v871
    %s874 = smul.u32 6, 2
    %s875 = smul.addr %s874, 8
    %s876 = scalar_lea.vmem [#allocation2], %s875
    %v877 = vld [vmem:[%s876] sm:$0xff]
    %v878 = vld [vmem:[%s876 + $0x8] sm:$0xff]
    %v880 = vsel %vm222, %v871, 0
    %882 = vmatpush.msra.mxu0 0.0
    %883 = vmatpush.msra.mxu0 0.0
    %884 = vmatpush.msra.mxu0 0.0
    %885 = vmatpush.msra.mxu0 0.0
    %886 = vmatpush.msra.mxu0 0.0
    %887 = vmatpush.msra.mxu0 0.0
    %888 = vmatpush.msra.mxu0 0.0
    %889 = vmatpush.msra.mxu0 0.0
    %890 = vmatpush.msra.mxu0 %v215
    %891 = vmatpush.msra.mxu0 %v213
    %892 = vmatpush.msra.mxu0 %v211
    %893 = vmatpush.msra.mxu0 %v209
    %894 = vmatpush.msra.mxu0 %v207
    %895 = vmatpush.msra.mxu0 %v205
    %896 = vmatpush.msra.mxu0 %v203
    %897 = vmatpush.msra.mxu0 %v201
    %898 = vmatmul.f32.gmra.mxu0 %v880
    %v899 = vpop.f32.mrf.mxu0
    %v900 = vadd.f32 0.0, %v899
    %901 = vdwg.mxu0
    %902 = vmatpush.msra.mxu0 0.0
    %903 = vmatpush.msra.mxu0 0.0
    %904 = vmatpush.msra.mxu0 0.0
    %905 = vmatpush.msra.mxu0 0.0
    %906 = vmatpush.msra.mxu0 0.0
    %907 = vmatpush.msra.mxu0 0.0
    %908 = vmatpush.msra.mxu0 0.0
    %909 = vmatpush.msra.mxu0 0.0
    %910 = vmatpush.msra.mxu0 %v216
    %911 = vmatpush.msra.mxu0 %v214
    %912 = vmatpush.msra.mxu0 %v212
    %913 = vmatpush.msra.mxu0 %v210
    %914 = vmatpush.msra.mxu0 %v208
    %915 = vmatpush.msra.mxu0 %v206
    %916 = vmatpush.msra.mxu0 %v204
    %917 = vmatpush.msra.mxu0 %v202
    %918 = vmatmul.f32.gmra.mxu0 %v880
    %v919 = vpop.f32.mrf.mxu0
    %v920 = vadd.f32 0.0, %v919
    %921 = vdwg.mxu0
    %v922 = vadd.f32 %v877, %v900
    %v923 = vadd.f32 %v878, %v920
    %v924 = vxor.u32 %v922, 2147483648
    %v925 = vxor.u32 %v923, 2147483648
    %v926 = vmul.f32 %v924, 1.442695
    %v927 = vpow.pop %v926
    %v928 = vmul.f32 %v925, 1.442695
    %v929 = vpow.pop %v928
    %v930 = vadd.f32 %v927, 1.0
    %v931 = vadd.f32 %v929, 1.0
    %v932 = vrcp.pop %v930
    %v933 = vmul.f32 %v930, %v932
    %v934 = vsub.f32 1.0, %v933
    %v935 = vmul.f32 %v932, %v934
    %v936 = vadd.f32 %v932, %v935
    %vm937 = vweird.f32 %v930
    %vm938 = vweird.f32 %v932
    %vm939 = vmor %vm937, %vm938
    %v940 = vsel %vm939, %v932, %v936
    %v941 = vand.u32 2147483647, %v930
    %vm942 = vcmp.eq.f32.partialorder %v941, 8.507059e+37
    %v943 = vand.u32 %v930, 2147483648
    %v944 = vor.u32 1.1754944e-38, %v943
    %v945 = vsel %vm942, %v944, %v940
    %v946 = vmul.f32 1.0, %v945
    %v947 = vrcp.pop %v931
    %v948 = vmul.f32 %v931, %v947
    %v949 = vsub.f32 1.0, %v948
    %v950 = vmul.f32 %v947, %v949
    %v951 = vadd.f32 %v947, %v950
    %vm952 = vweird.f32 %v931
    %vm953 = vweird.f32 %v947
    %vm954 = vmor %vm952, %vm953
    %v955 = vsel %vm954, %v947, %v951
    %v956 = vand.u32 2147483647, %v931
    %vm957 = vcmp.eq.f32.partialorder %v956, 8.507059e+37
    %v958 = vand.u32 %v931, 2147483648
    %v959 = vor.u32 1.1754944e-38, %v958
    %v960 = vsel %vm957, %v959, %v955
    %v961 = vmul.f32 1.0, %v960
    %v962 = vtanh.pop %v923
    %v963 = vmul.f32 %v946, %v865
    %965 = vrot.lane.b32.xlu0 %v962, 64
    %v966 = vpop.permute.xlu0 %965
    %v968 = vmul.f32 %v946, %v966
    %970 = vrot.lane.b32.xlu0 %v968, 64
    %v971 = vpop.permute.xlu0 %970
    %v973 = vadd.f32 %v963, %v971
    %v974 = vtanh.pop %v973
    %976 = vrot.lane.b32.xlu0 %v974, 64
    %v977 = vpop.permute.xlu0 %976
    %v979 = vmul.f32 %v961, %v977
    %980 = vst.msk [vmem:[%s436] sm:$0xff] %vm78, %v979
    %981 = vst.msk [vmem:[%s434] sm:$0xff] %vm326, %v979
    %s982 = smul.u32 7, 2
    %s983 = smul.addr %s982, 8
    %s984 = scalar_lea.vmem [#allocation2], %s983
    %v985 = vld [vmem:[%s984] sm:$0xff]
    %v986 = vld [vmem:[%s984 + $0x8] sm:$0xff]
    %v988 = vsel %vm222, %v979, 0
    %990 = vmatpush.msra.mxu0 0.0
    %991 = vmatpush.msra.mxu0 0.0
    %992 = vmatpush.msra.mxu0 0.0
    %993 = vmatpush.msra.mxu0 0.0
    %994 = vmatpush.msra.mxu0 0.0
    %995 = vmatpush.msra.mxu0 0.0
    %996 = vmatpush.msra.mxu0 0.0
    %997 = vmatpush.msra.mxu0 0.0
    %998 = vmatpush.msra.mxu0 %v215
    %999 = vmatpush.msra.mxu0 %v213
    %1000 = vmatpush.msra.mxu0 %v211
    %1001 = vmatpush.msra.mxu0 %v209
    %1002 = vmatpush.msra.mxu0 %v207
    %1003 = vmatpush.msra.mxu0 %v205
    %1004 = vmatpush.msra.mxu0 %v203
    %1005 = vmatpush.msra.mxu0 %v201
    %1006 = vmatmul.f32.gmra.mxu0 %v988
    %v1007 = vpop.f32.mrf.mxu0
    %v1008 = vadd.f32 0.0, %v1007
    %1009 = vdwg.mxu0
    %1010 = vmatpush.msra.mxu0 0.0
    %1011 = vmatpush.msra.mxu0 0.0
    %1012 = vmatpush.msra.mxu0 0.0
    %1013 = vmatpush.msra.mxu0 0.0
    %1014 = vmatpush.msra.mxu0 0.0
    %1015 = vmatpush.msra.mxu0 0.0
    %1016 = vmatpush.msra.mxu0 0.0
    %1017 = vmatpush.msra.mxu0 0.0
    %1018 = vmatpush.msra.mxu0 %v216
    %1019 = vmatpush.msra.mxu0 %v214
    %1020 = vmatpush.msra.mxu0 %v212
    %1021 = vmatpush.msra.mxu0 %v210
    %1022 = vmatpush.msra.mxu0 %v208
    %1023 = vmatpush.msra.mxu0 %v206
    %1024 = vmatpush.msra.mxu0 %v204
    %1025 = vmatpush.msra.mxu0 %v202
    %1026 = vmatmul.f32.gmra.mxu0 %v988
    %v1027 = vpop.f32.mrf.mxu0
    %v1028 = vadd.f32 0.0, %v1027
    %1029 = vdwg.mxu0
    %v1030 = vadd.f32 %v985, %v1008
    %v1031 = vadd.f32 %v986, %v1028
    %v1032 = vxor.u32 %v1030, 2147483648
    %v1033 = vxor.u32 %v1031, 2147483648
    %v1034 = vmul.f32 %v1032, 1.442695
    %v1035 = vpow.pop %v1034
    %v1036 = vmul.f32 %v1033, 1.442695
    %v1037 = vpow.pop %v1036
    %v1038 = vadd.f32 %v1035, 1.0
    %v1039 = vadd.f32 %v1037, 1.0
    %v1040 = vrcp.pop %v1038
    %v1041 = vmul.f32 %v1038, %v1040
    %v1042 = vsub.f32 1.0, %v1041
    %v1043 = vmul.f32 %v1040, %v1042
    %v1044 = vadd.f32 %v1040, %v1043
    %vm1045 = vweird.f32 %v1038
    %vm1046 = vweird.f32 %v1040
    %vm1047 = vmor %vm1045, %vm1046
    %v1048 = vsel %vm1047, %v1040, %v1044
    %v1049 = vand.u32 2147483647, %v1038
    %vm1050 = vcmp.eq.f32.partialorder %v1049, 8.507059e+37
    %v1051 = vand.u32 %v1038, 2147483648
    %v1052 = vor.u32 1.1754944e-38, %v1051
    %v1053 = vsel %vm1050, %v1052, %v1048
    %v1054 = vmul.f32 1.0, %v1053
    %v1055 = vrcp.pop %v1039
    %v1056 = vmul.f32 %v1039, %v1055
    %v1057 = vsub.f32 1.0, %v1056
    %v1058 = vmul.f32 %v1055, %v1057
    %v1059 = vadd.f32 %v1055, %v1058
    %vm1060 = vweird.f32 %v1039
    %vm1061 = vweird.f32 %v1055
    %vm1062 = vmor %vm1060, %vm1061
    %v1063 = vsel %vm1062, %v1055, %v1059
    %v1064 = vand.u32 2147483647, %v1039
    %vm1065 = vcmp.eq.f32.partialorder %v1064, 8.507059e+37
    %v1066 = vand.u32 %v1039, 2147483648
    %v1067 = vor.u32 1.1754944e-38, %v1066
    %v1068 = vsel %vm1065, %v1067, %v1063
    %v1069 = vmul.f32 1.0, %v1068
    %v1070 = vtanh.pop %v1031
    %v1071 = vmul.f32 %v1054, %v973
    %1073 = vrot.lane.b32.xlu0 %v1070, 64
    %v1074 = vpop.permute.xlu0 %1073
    %v1076 = vmul.f32 %v1054, %v1074
    %1078 = vrot.lane.b32.xlu0 %v1076, 64
    %v1079 = vpop.permute.xlu0 %1078
    %v1081 = vadd.f32 %v1071, %v1079
    %v1082 = vtanh.pop %v1081
    %1084 = vrot.lane.b32.xlu0 %v1082, 64
    %v1085 = vpop.permute.xlu0 %1084
    %v1087 = vmul.f32 %v1069, %v1085
    %1088 = vst.msk [vmem:[%s325] sm:$0xff] %vm78, %v1087
    %1089 = vst.msk [vmem:[#allocation3] sm:$0xff] %vm326, %v1087
    %v1090 = vld [vmem:[#allocation3] sm:$0xff]
    %v1091 = vld [vmem:[#allocation3 + $0x8] sm:$0xff]
    %v1092 = vld [vmem:[#allocation3 + $0x10] sm:$0xff]
    %v1093 = vld [vmem:[#allocation3 + $0x18] sm:$0xff]
    %v1094 = vld [vmem:[#allocation3 + $0x20] sm:$0xff]
    %v1095 = vld [vmem:[#allocation3 + $0x28] sm:$0xff]
    %v1096 = vld [vmem:[#allocation3 + $0x30] sm:$0xff]
    %v1097 = vld [vmem:[#allocation3 + $0x38] sm:$0xff]
    %v1098 = vld [vmem:[#allocation7] sm:$0xff]
    %v1099 = vld [vmem:[#allocation7 + $0x8] sm:$0xff]
    %v1100 = vld [vmem:[#allocation7 + $0x10] sm:$0xff]
    %v1101 = vld [vmem:[#allocation7 + $0x18] sm:$0xff]
    %v1102 = vld [vmem:[#allocation7 + $0x20] sm:$0xff]
    %v1103 = vld [vmem:[#allocation7 + $0x28] sm:$0xff]
    %v1104 = vld [vmem:[#allocation7 + $0x30] sm:$0xff]
    %v1105 = vld [vmem:[#allocation7 + $0x38] sm:$0xff]
    %v1106 = vld [vmem:[%s5] sm:$0x1]
    %v1108 = vperm.slane %v1106, 0
    %v1111 = vsel %vm222, %v1090, 0
    %v1114 = vsel %vm222, %v1091, 0
    %v1117 = vsel %vm222, %v1092, 0
    %v1120 = vsel %vm222, %v1093, 0
    %v1123 = vsel %vm222, %v1094, 0
    %v1126 = vsel %vm222, %v1095, 0
    %v1129 = vsel %vm222, %v1096, 0
    %v1132 = vsel %vm222, %v1097, 0
    %1134 = vmatpush.msra.mxu0 0.0
    %1135 = vmatpush.msra.mxu0 0.0
    %1136 = vmatpush.msra.mxu0 0.0
    %1137 = vmatpush.msra.mxu0 0.0
    %1138 = vmatpush.msra.mxu0 0.0
    %1139 = vmatpush.msra.mxu0 0.0
    %1140 = vmatpush.msra.mxu0 0.0
    %1141 = vmatpush.msra.mxu0 0.0
    %1142 = vmatpush.msra.mxu0 %v1105
    %1143 = vmatpush.msra.mxu0 %v1104
    %1144 = vmatpush.msra.mxu0 %v1103
    %1145 = vmatpush.msra.mxu0 %v1102
    %1146 = vmatpush.msra.mxu0 %v1101
    %1147 = vmatpush.msra.mxu0 %v1100
    %1148 = vmatpush.msra.mxu0 %v1099
    %1149 = vmatpush.msra.mxu0 %v1098
    %1150 = vmatmul.f32.gmra.mxu0 %v1111
    %v1151 = vpop.f32.mrf.mxu0
    %v1152 = vadd.f32 %v1108, %v1151
    %1153 = vmatmul.f32.gmra.mxu0 %v1114
    %v1154 = vpop.f32.mrf.mxu0
    %v1155 = vadd.f32 %v1108, %v1154
    %1156 = vmatmul.f32.gmra.mxu0 %v1117
    %v1157 = vpop.f32.mrf.mxu0
    %v1158 = vadd.f32 %v1108, %v1157
    %1159 = vmatmul.f32.gmra.mxu0 %v1120
    %v1160 = vpop.f32.mrf.mxu0
    %v1161 = vadd.f32 %v1108, %v1160
    %1162 = vmatmul.f32.gmra.mxu0 %v1123
    %v1163 = vpop.f32.mrf.mxu0
    %v1164 = vadd.f32 %v1108, %v1163
    %1165 = vmatmul.f32.gmra.mxu0 %v1126
    %v1166 = vpop.f32.mrf.mxu0
    %v1167 = vadd.f32 %v1108, %v1166
    %1168 = vmatmul.f32.gmra.mxu0 %v1129
    %v1169 = vpop.f32.mrf.mxu0
    %v1170 = vadd.f32 %v1108, %v1169
    %1171 = vmatmul.f32.gmra.mxu0 %v1132
    %v1172 = vpop.f32.mrf.mxu0
    %v1173 = vadd.f32 %v1108, %v1172
    %1174 = vdwg.mxu0
    %1175 = vst [vmem:[#allocation9] sm:$0xff] %v1152
    %1176 = vst [vmem:[#allocation9 + $0x8] sm:$0xff] %v1155
    %1177 = vst [vmem:[#allocation9 + $0x10] sm:$0xff] %v1158
    %1178 = vst [vmem:[#allocation9 + $0x18] sm:$0xff] %v1161
    %1179 = vst [vmem:[#allocation9 + $0x20] sm:$0xff] %v1164
    %1180 = vst [vmem:[#allocation9 + $0x28] sm:$0xff] %v1167
    %1181 = vst [vmem:[#allocation9 + $0x30] sm:$0xff] %v1170
    %1182 = vst [vmem:[#allocation9 + $0x38] sm:$0xff] %v1173
    // Predicated region
    $region34: #{tpu_custom_call.1} parent=1 // pred_check
      _
    $region35: #{tpu_custom_call.1} parent=1 // pred_check_branch
      %1184 = sbr.rel (0) target = $region37
    $region36: #{tpu_custom_call.1} parent=1 // pred_region
      %1186 = vsyncadd [#allocation6], 0
      %s1187 = sshll.u32 [#allocation9], 4
      %s1188 = int_to_ptr.vmem [resolvable:$true] %s1187
      %s1189 = sshll.u32 %s6, 4
      %s1190 = int_to_ptr.hbm [resolvable:$true] %s1189
      %1195 = dma.vmem_to_hbm [thread:$0]  %s1188, 1024, %s1190, [#allocation6], 128, 128, 8
    $region37: #{tpu_custom_call.1} parent=1 // pred_fallthru
      _
    // Predicated region
    $region38: #{tpu_custom_call.1} parent=1 // pred_check
      _
    $region39: #{tpu_custom_call.1} parent=1 // pred_check_branch
      %1197 = sbr.rel (0) target = $region41
    $region40: #{tpu_custom_call.1} parent=1 // pred_region
      %1199 = dma.done [#allocation6], 1024
    $region41: #{tpu_custom_call.1} parent=1 // pred_fallthru
      _
    %1200 = vsyncpa [#allocation5], 1
    %1201 = vsyncpa [#allocation8], 1
    %1202 = vsyncpa [#allocation6], 1

</llo_original>
